<compile_context>
chip_gen: v6e
topology: v6e:2x2x1
jax: 0.10.0
libtpu: 0.0.40
codegen_flags: <defaults>
</compile_context>

<pallas_src>
import functools

import numpy as np
import jax
import jax.numpy as jnp
from jax.experimental import pallas as pl
from jax.experimental.pallas import tpu as pltpu

from scipy.optimize import linear_sum_assignment
# TODO(synk): linear_sum_assignment (Hungarian algorithm) has no clean Pallas
# equivalent; it runs on host over the kernel-computed cost matrix.


def _round_up(x, m):
    return ((x + m - 1) // m) * m


def _cost_kernel(conf_ref, obox_ref, okpt_ref, tboxT_ref, tkptT_ref, tmaskT_ref,
                 c_ref, *, w_conf, w_bbox, w_giou, w_kpts_scaled, n_kpt):
    """One [TN, T_pad] tile of the matching cost matrix, all lane-dense."""
    conf = conf_ref[...]            # [TN, 1]
    obox = obox_ref[...]            # [TN, 4]   cxcywh (predictions)
    okpt = okpt_ref[...]            # [TN, K]   unscaled keypoints
    tboxT = tboxT_ref[...]          # [4, T]    cxcywh (targets, transposed)
    tkptT = tkptT_ref[...]          # [K, T]    unscaled keypoints (transposed)
    tmaskT = tmaskT_ref[...]        # [K, T]    visibility mask (transposed)

    alpha = 0.25
    eps = 1e-8

    # ---- focal-style confidence cost, [TN, 1] (gamma=2 -> explicit square) ----
    om = 1.0 - conf
    cost_conf = (alpha * w_conf) * om * om * (-jnp.log(conf + eps))

    # per-coordinate columns / rows ([TN,1] and [1,T])
    ocx, ocy, ow, oh = obox[:, 0:1], obox[:, 1:2], obox[:, 2:3], obox[:, 3:4]
    tcx, tcy, tw, th = tboxT[0:1, :], tboxT[1:2, :], tboxT[2:3, :], tboxT[3:4, :]

    # ---- L1 box cost, [TN, T] ----
    cost_bbox = (jnp.abs(ocx - tcx) + jnp.abs(ocy - tcy)
                 + jnp.abs(ow - tw) + jnp.abs(oh - th))

    # ---- generalized IoU (cxcywh -> xyxy done per coordinate) ----
    px0, px1 = ocx - 0.5 * ow, ocx + 0.5 * ow          # [TN, 1]
    py0, py1 = ocy - 0.5 * oh, ocy + 0.5 * oh
    tx0, tx1 = tcx - 0.5 * tw, tcx + 0.5 * tw          # [1, T]
    ty0, ty1 = tcy - 0.5 * th, tcy + 0.5 * th

    area_p = (px1 - px0) * (py1 - py0)                 # [TN, 1]
    area_t = (tx1 - tx0) * (ty1 - ty0)                 # [1, T]

    iw = jnp.maximum(jnp.minimum(px1, tx1) - jnp.maximum(px0, tx0), 0.0)  # [TN, T]
    ih = jnp.maximum(jnp.minimum(py1, ty1) - jnp.maximum(py0, ty0), 0.0)
    inter = iw * ih
    union = area_p + area_t - inter
    iou = inter * pl.reciprocal(union + eps, approx=True)

    ew = jnp.maximum(jnp.maximum(px1, tx1) - jnp.minimum(px0, tx0), 0.0)
    eh = jnp.maximum(jnp.maximum(py1, ty1) - jnp.minimum(py0, ty0), 0.0)
    area_e = ew * eh
    giou = iou - (area_e - union) * pl.reciprocal(area_e + eps, approx=True)

    # ---- masked keypoint L1 mean (1/scale folded into w_kpts_scaled) ----
    vis = jnp.sum(tmaskT, axis=0, keepdims=True)                        # [1, T]
    inv_vis_w = w_kpts_scaled * pl.reciprocal(jnp.maximum(vis, 1e-6))   # [1, T]
    kpt_acc = jnp.zeros_like(cost_bbox)                                 # [TN, T]
    for k in range(n_kpt):
        kpt_acc = kpt_acc + jnp.abs(okpt[:, k:k + 1] - tkptT[k:k + 1, :]) * tmaskT[k:k + 1, :]

    total = cost_conf + w_bbox * cost_bbox - w_giou * giou + kpt_acc * inv_vis_w
    c_ref[...] = total.astype(c_ref.dtype)


def compute_cost_matrix(out_conf, out_bbox, out_kpts,
                        tgt_bbox, tgt_kpts, tgt_kpts_mask,
                        *, cost_conf=1.0, cost_bbox=1.0, cost_giou=1.0,
                        cost_kpts=10.0, j2ds_norm_scale=518.0):
    N, K = out_kpts.shape
    T = tgt_bbox.shape[0]

    # Tile N (multiple of 8), pad T to a multiple of 128 for lane-dense tiles
    # and unmasked full-lane stores.  Padding is sliced off afterwards.
    TN = min(256, _round_up(N, 8))
    N_pad = _round_up(N, TN)
    T_pad = _round_up(T, 128)
    pad_n = N_pad - N
    pad_t = T_pad - T

    conf_p = jnp.pad(out_conf, ((0, pad_n), (0, 0)))
    obox_p = jnp.pad(out_bbox, ((0, pad_n), (0, 0)))
    okpt_p = jnp.pad(out_kpts, ((0, pad_n), (0, 0)))

    # Targets transposed so T sits on the 128-lane axis.  Padded target columns
    # get mask=1 / zero boxes; with the in-kernel eps they stay finite and are
    # discarded by the final slice.
    tboxT = jnp.pad(tgt_bbox.T, ((0, 0), (0, pad_t)))
    tkptT = jnp.pad(tgt_kpts.T, ((0, 0), (0, pad_t)))
    tmaskT = jnp.pad(tgt_kpts_mask.T, ((0, 0), (0, pad_t)), constant_values=1.0)

    kernel = functools.partial(
        _cost_kernel,
        w_conf=float(cost_conf), w_bbox=float(cost_bbox), w_giou=float(cost_giou),
        # L1 is homogeneous: sum|a/s - b/s| = (1/s) * sum|a - b|  -> fold 1/s here.
        w_kpts_scaled=float(cost_kpts) / float(j2ds_norm_scale),
        n_kpt=int(K))

    c = pl.pallas_call(
        kernel,
        out_shape=jax.ShapeDtypeStruct((N_pad, T_pad), jnp.float32),
        grid=(N_pad // TN,),
        in_specs=[
            pl.BlockSpec((TN, 1), lambda i: (i, 0)),       # conf
            pl.BlockSpec((TN, 4), lambda i: (i, 0)),       # pred boxes
            pl.BlockSpec((TN, K), lambda i: (i, 0)),       # pred kpts
            pl.BlockSpec((4, T_pad), lambda i: (0, 0)),    # tgt boxes (resident)
            pl.BlockSpec((K, T_pad), lambda i: (0, 0)),    # tgt kpts (resident)
            pl.BlockSpec((K, T_pad), lambda i: (0, 0)),    # tgt kpt mask (resident)
        ],
        out_specs=pl.BlockSpec((TN, T_pad), lambda i: (i, 0)),
        compiler_params=pltpu.CompilerParams(
            dimension_semantics=("parallel",)),
    )(conf_p, obox_p, okpt_p, tboxT, tkptT, tmaskT)

    return c[:N, :T]


def hungarian_matcher(outputs, targets, *, cost_conf=1.0, cost_bbox=1.0,
                      cost_giou=1.0, cost_kpts=10.0, j2ds_norm_scale=518.0):
    """JAX/Pallas port of HungarianMatcher.forward."""
    assert outputs['pred_confs'].shape[0] == len(targets)
    bs, num_queries, _ = outputs['pred_confs'].shape

    # --- glue: flatten / concat (plain JAX). No per-call device->host sync:
    # the visible-keypoint assert of the reference is handled in-kernel by a
    # clamp on vis_cnt (no-op when every target has >=1 visible keypoint). ---
    out_conf = outputs['pred_confs'].reshape(bs * num_queries, -1).astype(jnp.float32)
    out_bbox = outputs['pred_boxes'].reshape(bs * num_queries, 4).astype(jnp.float32)
    out_kpts = outputs['pred_j2ds'][..., :22, :].reshape(
        bs * num_queries, 44).astype(jnp.float32)

    tgt_bbox = jnp.concatenate([v['boxes'] for v in targets], axis=0).astype(jnp.float32)
    tgt_kpts = jnp.concatenate(
        [v['j2ds'][:, :22, :].reshape(v['j2ds'].shape[0], 44) for v in targets],
        axis=0).astype(jnp.float32)
    tgt_kpts_mask = jnp.concatenate(
        [v['j2ds_mask'][:, :22, :].reshape(v['j2ds_mask'].shape[0], 44) for v in targets],
        axis=0).astype(jnp.float32)

    # --- hot path: Pallas kernel computes the cost matrix ---
    C = compute_cost_matrix(
        out_conf, out_bbox, out_kpts, tgt_bbox, tgt_kpts, tgt_kpts_mask,
        cost_conf=cost_conf, cost_bbox=cost_bbox, cost_giou=cost_giou,
        cost_kpts=cost_kpts, j2ds_norm_scale=j2ds_norm_scale)
    C = jax.block_until_ready(C)

    # --- host: per-batch Hungarian assignment ---
    C_np = np.asarray(C).reshape(bs, num_queries, -1)
    sizes = [int(v['boxes'].shape[0]) for v in targets]
    splits = np.cumsum(sizes)[:-1]
    chunks = np.split(C_np, splits, axis=-1)
    indices = [linear_sum_assignment(chunks[i][i]) for i in range(bs)]
    return [(np.asarray(i, dtype=np.int64), np.asarray(j, dtype=np.int64))
            for i, j in indices]


if __name__ == "__main__":
    key = jax.random.PRNGKey(0)
    bs, nq, J = 2, 8, 24
    ks = jax.random.split(key, 8)

    pred_confs = jax.nn.sigmoid(jax.random.normal(ks[0], (bs, nq, 1)))
    pred_cxcy = jax.random.uniform(ks[1], (bs, nq, 2), minval=0.25, maxval=0.75)
    pred_wh = jax.random.uniform(ks[2], (bs, nq, 2), minval=0.1, maxval=0.4)
    pred_boxes = jnp.concatenate([pred_cxcy, pred_wh], axis=-1)
    pred_j2ds = jax.random.uniform(ks[3], (bs, nq, J, 2), minval=0.0, maxval=518.0)
    outputs = {"pred_confs": pred_confs, "pred_boxes": pred_boxes,
               "pred_j2ds": pred_j2ds}

    sizes = [3, 4]
    targets = []
    for b, nt in enumerate(sizes):
        kb = jax.random.split(ks[4 + b], 4)
        cxcy = jax.random.uniform(kb[0], (nt, 2), minval=0.25, maxval=0.75)
        wh = jax.random.uniform(kb[1], (nt, 2), minval=0.1, maxval=0.4)
        boxes = jnp.concatenate([cxcy, wh], axis=-1)
        j2ds = jax.random.uniform(kb[2], (nt, J, 2), minval=0.0, maxval=518.0)
        mask = (jax.random.uniform(kb[3], (nt, J, 2)) > 0.2).astype(jnp.float32)
        mask = mask.at[:, 0, :].set(1.0)  # guarantee every target has visible kpts
        targets.append({"boxes": boxes, "j2ds": j2ds, "j2ds_mask": mask})

    indices = hungarian_matcher(outputs, targets)

    # light sanity check on output structure
    assert len(indices) == bs
    for (i_idx, j_idx), nt in zip(indices, sizes):
        assert len(i_idx) == len(j_idx) == min(nq, nt)

    print("KERNEL_OK")
</pallas_src>

<mosaic_0001>
module attributes {stable_mosaic.version = 11 : i64} {
  func.func @_cost_kernel(%arg0: i32, %arg1: memref<16x1xf32, #tpu.memory_space<vmem>>, %arg2: memref<16x4xf32, #tpu.memory_space<vmem>>, %arg3: memref<16x44xf32, #tpu.memory_space<vmem>>, %arg4: memref<4x128xf32, #tpu.memory_space<vmem>>, %arg5: memref<44x128xf32, #tpu.memory_space<vmem>>, %arg6: memref<44x128xf32, #tpu.memory_space<vmem>>, %arg7: memref<16x128xf32, #tpu.memory_space<vmem>>) attributes {dimension_semantics = [#tpu.dimension_semantics<parallel>], iteration_bounds = array<i64: 1>, scalar_prefetch = 0 : i64, scratch_operands = 0 : i64, tpu.core_type = #tpu.core_type<tc>, window_params = [{transform_indices = @transform_0, window_bounds = array<i64: 16, 1>}, {transform_indices = @transform_1, window_bounds = array<i64: 16, 4>}, {transform_indices = @transform_2, window_bounds = array<i64: 16, 44>}, {pipeline_mode = #tpu.pipeline_mode<synchronous>, transform_indices = @transform_3, window_bounds = array<i64: 4, 128>}, {pipeline_mode = #tpu.pipeline_mode<synchronous>, transform_indices = @transform_4, window_bounds = array<i64: 44, 128>}, {pipeline_mode = #tpu.pipeline_mode<synchronous>, transform_indices = @transform_5, window_bounds = array<i64: 44, 128>}, {transform_indices = @transform_6, window_bounds = array<i64: 16, 128>}]} {
    %c0 = arith.constant 0 : index
    %c0_0 = arith.constant 0 : index
    %0 = vector.load %arg1[%c0, %c0_0] : memref<16x1xf32, #tpu.memory_space<vmem>>, vector<16x1xf32>
    %c0_1 = arith.constant 0 : index
    %c0_2 = arith.constant 0 : index
    %1 = vector.load %arg2[%c0_1, %c0_2] : memref<16x4xf32, #tpu.memory_space<vmem>>, vector<16x4xf32>
    %c0_3 = arith.constant 0 : index
    %c0_4 = arith.constant 0 : index
    %2 = vector.load %arg3[%c0_3, %c0_4] : memref<16x44xf32, #tpu.memory_space<vmem>>, vector<16x44xf32>
    %c0_5 = arith.constant 0 : index
    %c0_6 = arith.constant 0 : index
    %3 = vector.load %arg4[%c0_5, %c0_6] : memref<4x128xf32, #tpu.memory_space<vmem>>, vector<4x128xf32>
    %c0_7 = arith.constant 0 : index
    %c0_8 = arith.constant 0 : index
    %4 = vector.load %arg5[%c0_7, %c0_8] : memref<44x128xf32, #tpu.memory_space<vmem>>, vector<44x128xf32>
    %c0_9 = arith.constant 0 : index
    %c0_10 = arith.constant 0 : index
    %5 = vector.load %arg6[%c0_9, %c0_10] : memref<44x128xf32, #tpu.memory_space<vmem>>, vector<44x128xf32>
    %cst = arith.constant 1.000000e+00 : f32
    %6 = vector.broadcast %cst : f32 to vector<16x1xf32>
    %7 = arith.subf %6, %0 : vector<16x1xf32>
    %cst_11 = arith.constant 2.500000e-01 : f32
    %8 = vector.broadcast %cst_11 : f32 to vector<16x1xf32>
    %9 = arith.mulf %8, %7 : vector<16x1xf32>
    %10 = arith.mulf %9, %7 : vector<16x1xf32>
    %cst_12 = arith.constant 9.99999993E-9 : f32
    %11 = vector.broadcast %cst_12 : f32 to vector<16x1xf32>
    %12 = arith.addf %0, %11 : vector<16x1xf32>
    %13 = math.log %12 : vector<16x1xf32>
    %cst_13 = arith.constant 0.000000e+00 : f32
    %14 = vector.broadcast %cst_13 : f32 to vector<16x1xf32>
    %15 = arith.subf %14, %13 : vector<16x1xf32>
    %16 = arith.mulf %10, %15 : vector<16x1xf32>
    %17 = vector.extract_strided_slice %1 {offsets = [0, 0], sizes = [16, 1], strides = [1, 1]} : vector<16x4xf32> to vector<16x1xf32>
    %18 = vector.extract_strided_slice %1 {offsets = [0, 1], sizes = [16, 1], strides = [1, 1]} : vector<16x4xf32> to vector<16x1xf32>
    %19 = vector.extract_strided_slice %1 {offsets = [0, 2], sizes = [16, 1], strides = [1, 1]} : vector<16x4xf32> to vector<16x1xf32>
    %20 = vector.extract_strided_slice %1 {offsets = [0, 3], sizes = [16, 1], strides = [1, 1]} : vector<16x4xf32> to vector<16x1xf32>
    %21 = vector.extract_strided_slice %3 {offsets = [0, 0], sizes = [1, 128], strides = [1, 1]} : vector<4x128xf32> to vector<1x128xf32>
    %22 = vector.extract_strided_slice %3 {offsets = [1, 0], sizes = [1, 128], strides = [1, 1]} : vector<4x128xf32> to vector<1x128xf32>
    %23 = vector.extract_strided_slice %3 {offsets = [2, 0], sizes = [1, 128], strides = [1, 1]} : vector<4x128xf32> to vector<1x128xf32>
    %24 = vector.extract_strided_slice %3 {offsets = [3, 0], sizes = [1, 128], strides = [1, 1]} : vector<4x128xf32> to vector<1x128xf32>
    %25 = vector.broadcast %17 : vector<16x1xf32> to vector<16x128xf32>
    %26 = vector.broadcast %21 : vector<1x128xf32> to vector<16x128xf32>
    %27 = arith.subf %25, %26 : vector<16x128xf32>
    %28 = math.absf %27 : vector<16x128xf32>
    %29 = vector.broadcast %18 : vector<16x1xf32> to vector<16x128xf32>
    %30 = vector.broadcast %22 : vector<1x128xf32> to vector<16x128xf32>
    %31 = arith.subf %29, %30 : vector<16x128xf32>
    %32 = math.absf %31 : vector<16x128xf32>
    %33 = arith.addf %28, %32 : vector<16x128xf32>
    %34 = vector.broadcast %19 : vector<16x1xf32> to vector<16x128xf32>
    %35 = vector.broadcast %23 : vector<1x128xf32> to vector<16x128xf32>
    %36 = arith.subf %34, %35 : vector<16x128xf32>
    %37 = math.absf %36 : vector<16x128xf32>
    %38 = arith.addf %33, %37 : vector<16x128xf32>
    %39 = vector.broadcast %20 : vector<16x1xf32> to vector<16x128xf32>
    %40 = vector.broadcast %24 : vector<1x128xf32> to vector<16x128xf32>
    %41 = arith.subf %39, %40 : vector<16x128xf32>
    %42 = math.absf %41 : vector<16x128xf32>
    %43 = arith.addf %38, %42 : vector<16x128xf32>
    %cst_14 = arith.constant 5.000000e-01 : f32
    %44 = vector.broadcast %cst_14 : f32 to vector<16x1xf32>
    %45 = arith.mulf %44, %19 : vector<16x1xf32>
    %46 = arith.subf %17, %45 : vector<16x1xf32>
    %cst_15 = arith.constant 5.000000e-01 : f32
    %47 = vector.broadcast %cst_15 : f32 to vector<16x1xf32>
    %48 = arith.mulf %47, %19 : vector<16x1xf32>
    %49 = arith.addf %17, %48 : vector<16x1xf32>
    %cst_16 = arith.constant 5.000000e-01 : f32
    %50 = vector.broadcast %cst_16 : f32 to vector<16x1xf32>
    %51 = arith.mulf %50, %20 : vector<16x1xf32>
    %52 = arith.subf %18, %51 : vector<16x1xf32>
    %cst_17 = arith.constant 5.000000e-01 : f32
    %53 = vector.broadcast %cst_17 : f32 to vector<16x1xf32>
    %54 = arith.mulf %53, %20 : vector<16x1xf32>
    %55 = arith.addf %18, %54 : vector<16x1xf32>
    %cst_18 = arith.constant 5.000000e-01 : f32
    %56 = vector.broadcast %cst_18 : f32 to vector<1x128xf32>
    %57 = arith.mulf %56, %23 : vector<1x128xf32>
    %58 = arith.subf %21, %57 : vector<1x128xf32>
    %cst_19 = arith.constant 5.000000e-01 : f32
    %59 = vector.broadcast %cst_19 : f32 to vector<1x128xf32>
    %60 = arith.mulf %59, %23 : vector<1x128xf32>
    %61 = arith.addf %21, %60 : vector<1x128xf32>
    %cst_20 = arith.constant 5.000000e-01 : f32
    %62 = vector.broadcast %cst_20 : f32 to vector<1x128xf32>
    %63 = arith.mulf %62, %24 : vector<1x128xf32>
    %64 = arith.subf %22, %63 : vector<1x128xf32>
    %cst_21 = arith.constant 5.000000e-01 : f32
    %65 = vector.broadcast %cst_21 : f32 to vector<1x128xf32>
    %66 = arith.mulf %65, %24 : vector<1x128xf32>
    %67 = arith.addf %22, %66 : vector<1x128xf32>
    %68 = arith.subf %49, %46 : vector<16x1xf32>
    %69 = arith.subf %55, %52 : vector<16x1xf32>
    %70 = arith.mulf %68, %69 : vector<16x1xf32>
    %71 = arith.subf %61, %58 : vector<1x128xf32>
    %72 = arith.subf %67, %64 : vector<1x128xf32>
    %73 = arith.mulf %71, %72 : vector<1x128xf32>
    %74 = vector.broadcast %49 : vector<16x1xf32> to vector<16x128xf32>
    %75 = vector.broadcast %61 : vector<1x128xf32> to vector<16x128xf32>
    %76 = arith.minimumf %74, %75 : vector<16x128xf32>
    %77 = vector.broadcast %46 : vector<16x1xf32> to vector<16x128xf32>
    %78 = vector.broadcast %58 : vector<1x128xf32> to vector<16x128xf32>
    %79 = arith.maximumf %77, %78 : vector<16x128xf32>
    %80 = arith.subf %76, %79 : vector<16x128xf32>
    %cst_22 = arith.constant 0.000000e+00 : f32
    %81 = vector.broadcast %cst_22 : f32 to vector<16x128xf32>
    %82 = arith.maximumf %80, %81 : vector<16x128xf32>
    %83 = vector.broadcast %55 : vector<16x1xf32> to vector<16x128xf32>
    %84 = vector.broadcast %67 : vector<1x128xf32> to vector<16x128xf32>
    %85 = arith.minimumf %83, %84 : vector<16x128xf32>
    %86 = vector.broadcast %52 : vector<16x1xf32> to vector<16x128xf32>
    %87 = vector.broadcast %64 : vector<1x128xf32> to vector<16x128xf32>
    %88 = arith.maximumf %86, %87 : vector<16x128xf32>
    %89 = arith.subf %85, %88 : vector<16x128xf32>
    %cst_23 = arith.constant 0.000000e+00 : f32
    %90 = vector.broadcast %cst_23 : f32 to vector<16x128xf32>
    %91 = arith.maximumf %89, %90 : vector<16x128xf32>
    %92 = arith.mulf %82, %91 : vector<16x128xf32>
    %93 = vector.broadcast %70 : vector<16x1xf32> to vector<16x128xf32>
    %94 = vector.broadcast %73 : vector<1x128xf32> to vector<16x128xf32>
    %95 = arith.addf %93, %94 : vector<16x128xf32>
    %96 = arith.subf %95, %92 : vector<16x128xf32>
    %cst_24 = arith.constant 9.99999993E-9 : f32
    %97 = vector.broadcast %cst_24 : f32 to vector<16x128xf32>
    %98 = arith.addf %96, %97 : vector<16x128xf32>
    %99 = tpu.reciprocal %98 {approx = true} : vector<16x128xf32> -> vector<16x128xf32>
    %100 = arith.mulf %92, %99 : vector<16x128xf32>
    %101 = vector.broadcast %49 : vector<16x1xf32> to vector<16x128xf32>
    %102 = vector.broadcast %61 : vector<1x128xf32> to vector<16x128xf32>
    %103 = arith.maximumf %101, %102 : vector<16x128xf32>
    %104 = vector.broadcast %46 : vector<16x1xf32> to vector<16x128xf32>
    %105 = vector.broadcast %58 : vector<1x128xf32> to vector<16x128xf32>
    %106 = arith.minimumf %104, %105 : vector<16x128xf32>
    %107 = arith.subf %103, %106 : vector<16x128xf32>
    %cst_25 = arith.constant 0.000000e+00 : f32
    %108 = vector.broadcast %cst_25 : f32 to vector<16x128xf32>
    %109 = arith.maximumf %107, %108 : vector<16x128xf32>
    %110 = vector.broadcast %55 : vector<16x1xf32> to vector<16x128xf32>
    %111 = vector.broadcast %67 : vector<1x128xf32> to vector<16x128xf32>
    %112 = arith.maximumf %110, %111 : vector<16x128xf32>
    %113 = vector.broadcast %52 : vector<16x1xf32> to vector<16x128xf32>
    %114 = vector.broadcast %64 : vector<1x128xf32> to vector<16x128xf32>
    %115 = arith.minimumf %113, %114 : vector<16x128xf32>
    %116 = arith.subf %112, %115 : vector<16x128xf32>
    %cst_26 = arith.constant 0.000000e+00 : f32
    %117 = vector.broadcast %cst_26 : f32 to vector<16x128xf32>
    %118 = arith.maximumf %116, %117 : vector<16x128xf32>
    %119 = arith.mulf %109, %118 : vector<16x128xf32>
    %120 = arith.subf %119, %96 : vector<16x128xf32>
    %cst_27 = arith.constant 9.99999993E-9 : f32
    %121 = vector.broadcast %cst_27 : f32 to vector<16x128xf32>
    %122 = arith.addf %119, %121 : vector<16x128xf32>
    %123 = tpu.reciprocal %122 {approx = true} : vector<16x128xf32> -> vector<16x128xf32>
    %124 = arith.mulf %120, %123 : vector<16x128xf32>
    %125 = arith.subf %100, %124 : vector<16x128xf32>
    %cst_28 = arith.constant dense<0.000000e+00> : vector<128xf32>
    %126 = vector.multi_reduction <add>, %5, %cst_28 [0] : vector<44x128xf32> to vector<128xf32>
    %127 = vector.shape_cast %126 : vector<128xf32> to vector<1x128xf32>
    %cst_29 = arith.constant 9.99999997E-7 : f32
    %128 = vector.broadcast %cst_29 : f32 to vector<1x128xf32>
    %129 = arith.maximumf %127, %128 : vector<1x128xf32>
    %130 = tpu.reciprocal %129 : vector<1x128xf32> -> vector<1x128xf32>
    %cst_30 = arith.constant 0.0193050187 : f32
    %131 = vector.broadcast %cst_30 : f32 to vector<1x128xf32>
    %132 = arith.mulf %131, %130 : vector<1x128xf32>
    %cst_31 = arith.constant 0.000000e+00 : f32
    %133 = vector.broadcast %cst_31 : f32 to vector<16x128xf32>
    %134 = vector.extract_strided_slice %2 {offsets = [0, 0], sizes = [16, 1], strides = [1, 1]} : vector<16x44xf32> to vector<16x1xf32>
    %135 = vector.extract_strided_slice %4 {offsets = [0, 0], sizes = [1, 128], strides = [1, 1]} : vector<44x128xf32> to vector<1x128xf32>
    %136 = vector.broadcast %134 : vector<16x1xf32> to vector<16x128xf32>
    %137 = vector.broadcast %135 : vector<1x128xf32> to vector<16x128xf32>
    %138 = arith.subf %136, %137 : vector<16x128xf32>
    %139 = math.absf %138 : vector<16x128xf32>
    %140 = vector.extract_strided_slice %5 {offsets = [0, 0], sizes = [1, 128], strides = [1, 1]} : vector<44x128xf32> to vector<1x128xf32>
    %141 = vector.broadcast %140 : vector<1x128xf32> to vector<16x128xf32>
    %142 = arith.mulf %139, %141 : vector<16x128xf32>
    %143 = arith.addf %133, %142 : vector<16x128xf32>
    %144 = vector.extract_strided_slice %2 {offsets = [0, 1], sizes = [16, 1], strides = [1, 1]} : vector<16x44xf32> to vector<16x1xf32>
    %145 = vector.extract_strided_slice %4 {offsets = [1, 0], sizes = [1, 128], strides = [1, 1]} : vector<44x128xf32> to vector<1x128xf32>
    %146 = vector.broadcast %144 : vector<16x1xf32> to vector<16x128xf32>
    %147 = vector.broadcast %145 : vector<1x128xf32> to vector<16x128xf32>
    %148 = arith.subf %146, %147 : vector<16x128xf32>
    %149 = math.absf %148 : vector<16x128xf32>
    %150 = vector.extract_strided_slice %5 {offsets = [1, 0], sizes = [1, 128], strides = [1, 1]} : vector<44x128xf32> to vector<1x128xf32>
    %151 = vector.broadcast %150 : vector<1x128xf32> to vector<16x128xf32>
    %152 = arith.mulf %149, %151 : vector<16x128xf32>
    %153 = arith.addf %143, %152 : vector<16x128xf32>
    %154 = vector.extract_strided_slice %2 {offsets = [0, 2], sizes = [16, 1], strides = [1, 1]} : vector<16x44xf32> to vector<16x1xf32>
    %155 = vector.extract_strided_slice %4 {offsets = [2, 0], sizes = [1, 128], strides = [1, 1]} : vector<44x128xf32> to vector<1x128xf32>
    %156 = vector.broadcast %154 : vector<16x1xf32> to vector<16x128xf32>
    %157 = vector.broadcast %155 : vector<1x128xf32> to vector<16x128xf32>
    %158 = arith.subf %156, %157 : vector<16x128xf32>
    %159 = math.absf %158 : vector<16x128xf32>
    %160 = vector.extract_strided_slice %5 {offsets = [2, 0], sizes = [1, 128], strides = [1, 1]} : vector<44x128xf32> to vector<1x128xf32>
    %161 = vector.broadcast %160 : vector<1x128xf32> to vector<16x128xf32>
    %162 = arith.mulf %159, %161 : vector<16x128xf32>
    %163 = arith.addf %153, %162 : vector<16x128xf32>
    %164 = vector.extract_strided_slice %2 {offsets = [0, 3], sizes = [16, 1], strides = [1, 1]} : vector<16x44xf32> to vector<16x1xf32>
    %165 = vector.extract_strided_slice %4 {offsets = [3, 0], sizes = [1, 128], strides = [1, 1]} : vector<44x128xf32> to vector<1x128xf32>
    %166 = vector.broadcast %164 : vector<16x1xf32> to vector<16x128xf32>
    %167 = vector.broadcast %165 : vector<1x128xf32> to vector<16x128xf32>
    %168 = arith.subf %166, %167 : vector<16x128xf32>
    %169 = math.absf %168 : vector<16x128xf32>
    %170 = vector.extract_strided_slice %5 {offsets = [3, 0], sizes = [1, 128], strides = [1, 1]} : vector<44x128xf32> to vector<1x128xf32>
    %171 = vector.broadcast %170 : vector<1x128xf32> to vector<16x128xf32>
    %172 = arith.mulf %169, %171 : vector<16x128xf32>
    %173 = arith.addf %163, %172 : vector<16x128xf32>
    %174 = vector.extract_strided_slice %2 {offsets = [0, 4], sizes = [16, 1], strides = [1, 1]} : vector<16x44xf32> to vector<16x1xf32>
    %175 = vector.extract_strided_slice %4 {offsets = [4, 0], sizes = [1, 128], strides = [1, 1]} : vector<44x128xf32> to vector<1x128xf32>
    %176 = vector.broadcast %174 : vector<16x1xf32> to vector<16x128xf32>
    %177 = vector.broadcast %175 : vector<1x128xf32> to vector<16x128xf32>
    %178 = arith.subf %176, %177 : vector<16x128xf32>
    %179 = math.absf %178 : vector<16x128xf32>
    %180 = vector.extract_strided_slice %5 {offsets = [4, 0], sizes = [1, 128], strides = [1, 1]} : vector<44x128xf32> to vector<1x128xf32>
    %181 = vector.broadcast %180 : vector<1x128xf32> to vector<16x128xf32>
    %182 = arith.mulf %179, %181 : vector<16x128xf32>
    %183 = arith.addf %173, %182 : vector<16x128xf32>
    %184 = vector.extract_strided_slice %2 {offsets = [0, 5], sizes = [16, 1], strides = [1, 1]} : vector<16x44xf32> to vector<16x1xf32>
    %185 = vector.extract_strided_slice %4 {offsets = [5, 0], sizes = [1, 128], strides = [1, 1]} : vector<44x128xf32> to vector<1x128xf32>
    %186 = vector.broadcast %184 : vector<16x1xf32> to vector<16x128xf32>
    %187 = vector.broadcast %185 : vector<1x128xf32> to vector<16x128xf32>
    %188 = arith.subf %186, %187 : vector<16x128xf32>
    %189 = math.absf %188 : vector<16x128xf32>
    %190 = vector.extract_strided_slice %5 {offsets = [5, 0], sizes = [1, 128], strides = [1, 1]} : vector<44x128xf32> to vector<1x128xf32>
    %191 = vector.broadcast %190 : vector<1x128xf32> to vector<16x128xf32>
    %192 = arith.mulf %189, %191 : vector<16x128xf32>
    %193 = arith.addf %183, %192 : vector<16x128xf32>
    %194 = vector.extract_strided_slice %2 {offsets = [0, 6], sizes = [16, 1], strides = [1, 1]} : vector<16x44xf32> to vector<16x1xf32>
    %195 = vector.extract_strided_slice %4 {offsets = [6, 0], sizes = [1, 128], strides = [1, 1]} : vector<44x128xf32> to vector<1x128xf32>
    %196 = vector.broadcast %194 : vector<16x1xf32> to vector<16x128xf32>
    %197 = vector.broadcast %195 : vector<1x128xf32> to vector<16x128xf32>
    %198 = arith.subf %196, %197 : vector<16x128xf32>
    %199 = math.absf %198 : vector<16x128xf32>
    %200 = vector.extract_strided_slice %5 {offsets = [6, 0], sizes = [1, 128], strides = [1, 1]} : vector<44x128xf32> to vector<1x128xf32>
    %201 = vector.broadcast %200 : vector<1x128xf32> to vector<16x128xf32>
    %202 = arith.mulf %199, %201 : vector<16x128xf32>
    %203 = arith.addf %193, %202 : vector<16x128xf32>
    %204 = vector.extract_strided_slice %2 {offsets = [0, 7], sizes = [16, 1], strides = [1, 1]} : vector<16x44xf32> to vector<16x1xf32>
    %205 = vector.extract_strided_slice %4 {offsets = [7, 0], sizes = [1, 128], strides = [1, 1]} : vector<44x128xf32> to vector<1x128xf32>
    %206 = vector.broadcast %204 : vector<16x1xf32> to vector<16x128xf32>
    %207 = vector.broadcast %205 : vector<1x128xf32> to vector<16x128xf32>
    %208 = arith.subf %206, %207 : vector<16x128xf32>
    %209 = math.absf %208 : vector<16x128xf32>
    %210 = vector.extract_strided_slice %5 {offsets = [7, 0], sizes = [1, 128], strides = [1, 1]} : vector<44x128xf32> to vector<1x128xf32>
    %211 = vector.broadcast %210 : vector<1x128xf32> to vector<16x128xf32>
    %212 = arith.mulf %209, %211 : vector<16x128xf32>
    %213 = arith.addf %203, %212 : vector<16x128xf32>
    %214 = vector.extract_strided_slice %2 {offsets = [0, 8], sizes = [16, 1], strides = [1, 1]} : vector<16x44xf32> to vector<16x1xf32>
    %215 = vector.extract_strided_slice %4 {offsets = [8, 0], sizes = [1, 128], strides = [1, 1]} : vector<44x128xf32> to vector<1x128xf32>
    %216 = vector.broadcast %214 : vector<16x1xf32> to vector<16x128xf32>
    %217 = vector.broadcast %215 : vector<1x128xf32> to vector<16x128xf32>
    %218 = arith.subf %216, %217 : vector<16x128xf32>
    %219 = math.absf %218 : vector<16x128xf32>
    %220 = vector.extract_strided_slice %5 {offsets = [8, 0], sizes = [1, 128], strides = [1, 1]} : vector<44x128xf32> to vector<1x128xf32>
    %221 = vector.broadcast %220 : vector<1x128xf32> to vector<16x128xf32>
    %222 = arith.mulf %219, %221 : vector<16x128xf32>
    %223 = arith.addf %213, %222 : vector<16x128xf32>
    %224 = vector.extract_strided_slice %2 {offsets = [0, 9], sizes = [16, 1], strides = [1, 1]} : vector<16x44xf32> to vector<16x1xf32>
    %225 = vector.extract_strided_slice %4 {offsets = [9, 0], sizes = [1, 128], strides = [1, 1]} : vector<44x128xf32> to vector<1x128xf32>
    %226 = vector.broadcast %224 : vector<16x1xf32> to vector<16x128xf32>
    %227 = vector.broadcast %225 : vector<1x128xf32> to vector<16x128xf32>
    %228 = arith.subf %226, %227 : vector<16x128xf32>
    %229 = math.absf %228 : vector<16x128xf32>
    %230 = vector.extract_strided_slice %5 {offsets = [9, 0], sizes = [1, 128], strides = [1, 1]} : vector<44x128xf32> to vector<1x128xf32>
    %231 = vector.broadcast %230 : vector<1x128xf32> to vector<16x128xf32>
    %232 = arith.mulf %229, %231 : vector<16x128xf32>
    %233 = arith.addf %223, %232 : vector<16x128xf32>
    %234 = vector.extract_strided_slice %2 {offsets = [0, 10], sizes = [16, 1], strides = [1, 1]} : vector<16x44xf32> to vector<16x1xf32>
    %235 = vector.extract_strided_slice %4 {offsets = [10, 0], sizes = [1, 128], strides = [1, 1]} : vector<44x128xf32> to vector<1x128xf32>
    %236 = vector.broadcast %234 : vector<16x1xf32> to vector<16x128xf32>
    %237 = vector.broadcast %235 : vector<1x128xf32> to vector<16x128xf32>
    %238 = arith.subf %236, %237 : vector<16x128xf32>
    %239 = math.absf %238 : vector<16x128xf32>
    %240 = vector.extract_strided_slice %5 {offsets = [10, 0], sizes = [1, 128], strides = [1, 1]} : vector<44x128xf32> to vector<1x128xf32>
    %241 = vector.broadcast %240 : vector<1x128xf32> to vector<16x128xf32>
    %242 = arith.mulf %239, %241 : vector<16x128xf32>
    %243 = arith.addf %233, %242 : vector<16x128xf32>
    %244 = vector.extract_strided_slice %2 {offsets = [0, 11], sizes = [16, 1], strides = [1, 1]} : vector<16x44xf32> to vector<16x1xf32>
    %245 = vector.extract_strided_slice %4 {offsets = [11, 0], sizes = [1, 128], strides = [1, 1]} : vector<44x128xf32> to vector<1x128xf32>
    %246 = vector.broadcast %244 : vector<16x1xf32> to vector<16x128xf32>
    %247 = vector.broadcast %245 : vector<1x128xf32> to vector<16x128xf32>
    %248 = arith.subf %246, %247 : vector<16x128xf32>
    %249 = math.absf %248 : vector<16x128xf32>
    %250 = vector.extract_strided_slice %5 {offsets = [11, 0], sizes = [1, 128], strides = [1, 1]} : vector<44x128xf32> to vector<1x128xf32>
    %251 = vector.broadcast %250 : vector<1x128xf32> to vector<16x128xf32>
    %252 = arith.mulf %249, %251 : vector<16x128xf32>
    %253 = arith.addf %243, %252 : vector<16x128xf32>
    %254 = vector.extract_strided_slice %2 {offsets = [0, 12], sizes = [16, 1], strides = [1, 1]} : vector<16x44xf32> to vector<16x1xf32>
    %255 = vector.extract_strided_slice %4 {offsets = [12, 0], sizes = [1, 128], strides = [1, 1]} : vector<44x128xf32> to vector<1x128xf32>
    %256 = vector.broadcast %254 : vector<16x1xf32> to vector<16x128xf32>
    %257 = vector.broadcast %255 : vector<1x128xf32> to vector<16x128xf32>
    %258 = arith.subf %256, %257 : vector<16x128xf32>
    %259 = math.absf %258 : vector<16x128xf32>
    %260 = vector.extract_strided_slice %5 {offsets = [12, 0], sizes = [1, 128], strides = [1, 1]} : vector<44x128xf32> to vector<1x128xf32>
    %261 = vector.broadcast %260 : vector<1x128xf32> to vector<16x128xf32>
    %262 = arith.mulf %259, %261 : vector<16x128xf32>
    %263 = arith.addf %253, %262 : vector<16x128xf32>
    %264 = vector.extract_strided_slice %2 {offsets = [0, 13], sizes = [16, 1], strides = [1, 1]} : vector<16x44xf32> to vector<16x1xf32>
    %265 = vector.extract_strided_slice %4 {offsets = [13, 0], sizes = [1, 128], strides = [1, 1]} : vector<44x128xf32> to vector<1x128xf32>
    %266 = vector.broadcast %264 : vector<16x1xf32> to vector<16x128xf32>
    %267 = vector.broadcast %265 : vector<1x128xf32> to vector<16x128xf32>
    %268 = arith.subf %266, %267 : vector<16x128xf32>
    %269 = math.absf %268 : vector<16x128xf32>
    %270 = vector.extract_strided_slice %5 {offsets = [13, 0], sizes = [1, 128], strides = [1, 1]} : vector<44x128xf32> to vector<1x128xf32>
    %271 = vector.broadcast %270 : vector<1x128xf32> to vector<16x128xf32>
    %272 = arith.mulf %269, %271 : vector<16x128xf32>
    %273 = arith.addf %263, %272 : vector<16x128xf32>
    %274 = vector.extract_strided_slice %2 {offsets = [0, 14], sizes = [16, 1], strides = [1, 1]} : vector<16x44xf32> to vector<16x1xf32>
    %275 = vector.extract_strided_slice %4 {offsets = [14, 0], sizes = [1, 128], strides = [1, 1]} : vector<44x128xf32> to vector<1x128xf32>
    %276 = vector.broadcast %274 : vector<16x1xf32> to vector<16x128xf32>
    %277 = vector.broadcast %275 : vector<1x128xf32> to vector<16x128xf32>
    %278 = arith.subf %276, %277 : vector<16x128xf32>
    %279 = math.absf %278 : vector<16x128xf32>
    %280 = vector.extract_strided_slice %5 {offsets = [14, 0], sizes = [1, 128], strides = [1, 1]} : vector<44x128xf32> to vector<1x128xf32>
    %281 = vector.broadcast %280 : vector<1x128xf32> to vector<16x128xf32>
    %282 = arith.mulf %279, %281 : vector<16x128xf32>
    %283 = arith.addf %273, %282 : vector<16x128xf32>
    %284 = vector.extract_strided_slice %2 {offsets = [0, 15], sizes = [16, 1], strides = [1, 1]} : vector<16x44xf32> to vector<16x1xf32>
    %285 = vector.extract_strided_slice %4 {offsets = [15, 0], sizes = [1, 128], strides = [1, 1]} : vector<44x128xf32> to vector<1x128xf32>
    %286 = vector.broadcast %284 : vector<16x1xf32> to vector<16x128xf32>
    %287 = vector.broadcast %285 : vector<1x128xf32> to vector<16x128xf32>
    %288 = arith.subf %286, %287 : vector<16x128xf32>
    %289 = math.absf %288 : vector<16x128xf32>
    %290 = vector.extract_strided_slice %5 {offsets = [15, 0], sizes = [1, 128], strides = [1, 1]} : vector<44x128xf32> to vector<1x128xf32>
    %291 = vector.broadcast %290 : vector<1x128xf32> to vector<16x128xf32>
    %292 = arith.mulf %289, %291 : vector<16x128xf32>
    %293 = arith.addf %283, %292 : vector<16x128xf32>
    %294 = vector.extract_strided_slice %2 {offsets = [0, 16], sizes = [16, 1], strides = [1, 1]} : vector<16x44xf32> to vector<16x1xf32>
    %295 = vector.extract_strided_slice %4 {offsets = [16, 0], sizes = [1, 128], strides = [1, 1]} : vector<44x128xf32> to vector<1x128xf32>
    %296 = vector.broadcast %294 : vector<16x1xf32> to vector<16x128xf32>
    %297 = vector.broadcast %295 : vector<1x128xf32> to vector<16x128xf32>
    %298 = arith.subf %296, %297 : vector<16x128xf32>
    %299 = math.absf %298 : vector<16x128xf32>
    %300 = vector.extract_strided_slice %5 {offsets = [16, 0], sizes = [1, 128], strides = [1, 1]} : vector<44x128xf32> to vector<1x128xf32>
    %301 = vector.broadcast %300 : vector<1x128xf32> to vector<16x128xf32>
    %302 = arith.mulf %299, %301 : vector<16x128xf32>
    %303 = arith.addf %293, %302 : vector<16x128xf32>
    %304 = vector.extract_strided_slice %2 {offsets = [0, 17], sizes = [16, 1], strides = [1, 1]} : vector<16x44xf32> to vector<16x1xf32>
    %305 = vector.extract_strided_slice %4 {offsets = [17, 0], sizes = [1, 128], strides = [1, 1]} : vector<44x128xf32> to vector<1x128xf32>
    %306 = vector.broadcast %304 : vector<16x1xf32> to vector<16x128xf32>
    %307 = vector.broadcast %305 : vector<1x128xf32> to vector<16x128xf32>
    %308 = arith.subf %306, %307 : vector<16x128xf32>
    %309 = math.absf %308 : vector<16x128xf32>
    %310 = vector.extract_strided_slice %5 {offsets = [17, 0], sizes = [1, 128], strides = [1, 1]} : vector<44x128xf32> to vector<1x128xf32>
    %311 = vector.broadcast %310 : vector<1x128xf32> to vector<16x128xf32>
    %312 = arith.mulf %309, %311 : vector<16x128xf32>
    %313 = arith.addf %303, %312 : vector<16x128xf32>
    %314 = vector.extract_strided_slice %2 {offsets = [0, 18], sizes = [16, 1], strides = [1, 1]} : vector<16x44xf32> to vector<16x1xf32>
    %315 = vector.extract_strided_slice %4 {offsets = [18, 0], sizes = [1, 128], strides = [1, 1]} : vector<44x128xf32> to vector<1x128xf32>
    %316 = vector.broadcast %314 : vector<16x1xf32> to vector<16x128xf32>
    %317 = vector.broadcast %315 : vector<1x128xf32> to vector<16x128xf32>
    %318 = arith.subf %316, %317 : vector<16x128xf32>
    %319 = math.absf %318 : vector<16x128xf32>
    %320 = vector.extract_strided_slice %5 {offsets = [18, 0], sizes = [1, 128], strides = [1, 1]} : vector<44x128xf32> to vector<1x128xf32>
    %321 = vector.broadcast %320 : vector<1x128xf32> to vector<16x128xf32>
    %322 = arith.mulf %319, %321 : vector<16x128xf32>
    %323 = arith.addf %313, %322 : vector<16x128xf32>
    %324 = vector.extract_strided_slice %2 {offsets = [0, 19], sizes = [16, 1], strides = [1, 1]} : vector<16x44xf32> to vector<16x1xf32>
    %325 = vector.extract_strided_slice %4 {offsets = [19, 0], sizes = [1, 128], strides = [1, 1]} : vector<44x128xf32> to vector<1x128xf32>
    %326 = vector.broadcast %324 : vector<16x1xf32> to vector<16x128xf32>
    %327 = vector.broadcast %325 : vector<1x128xf32> to vector<16x128xf32>
    %328 = arith.subf %326, %327 : vector<16x128xf32>
    %329 = math.absf %328 : vector<16x128xf32>
    %330 = vector.extract_strided_slice %5 {offsets = [19, 0], sizes = [1, 128], strides = [1, 1]} : vector<44x128xf32> to vector<1x128xf32>
    %331 = vector.broadcast %330 : vector<1x128xf32> to vector<16x128xf32>
    %332 = arith.mulf %329, %331 : vector<16x128xf32>
    %333 = arith.addf %323, %332 : vector<16x128xf32>
    %334 = vector.extract_strided_slice %2 {offsets = [0, 20], sizes = [16, 1], strides = [1, 1]} : vector<16x44xf32> to vector<16x1xf32>
    %335 = vector.extract_strided_slice %4 {offsets = [20, 0], sizes = [1, 128], strides = [1, 1]} : vector<44x128xf32> to vector<1x128xf32>
    %336 = vector.broadcast %334 : vector<16x1xf32> to vector<16x128xf32>
    %337 = vector.broadcast %335 : vector<1x128xf32> to vector<16x128xf32>
    %338 = arith.subf %336, %337 : vector<16x128xf32>
    %339 = math.absf %338 : vector<16x128xf32>
    %340 = vector.extract_strided_slice %5 {offsets = [20, 0], sizes = [1, 128], strides = [1, 1]} : vector<44x128xf32> to vector<1x128xf32>
    %341 = vector.broadcast %340 : vector<1x128xf32> to vector<16x128xf32>
    %342 = arith.mulf %339, %341 : vector<16x128xf32>
    %343 = arith.addf %333, %342 : vector<16x128xf32>
    %344 = vector.extract_strided_slice %2 {offsets = [0, 21], sizes = [16, 1], strides = [1, 1]} : vector<16x44xf32> to vector<16x1xf32>
    %345 = vector.extract_strided_slice %4 {offsets = [21, 0], sizes = [1, 128], strides = [1, 1]} : vector<44x128xf32> to vector<1x128xf32>
    %346 = vector.broadcast %344 : vector<16x1xf32> to vector<16x128xf32>
    %347 = vector.broadcast %345 : vector<1x128xf32> to vector<16x128xf32>
    %348 = arith.subf %346, %347 : vector<16x128xf32>
    %349 = math.absf %348 : vector<16x128xf32>
    %350 = vector.extract_strided_slice %5 {offsets = [21, 0], sizes = [1, 128], strides = [1, 1]} : vector<44x128xf32> to vector<1x128xf32>
    %351 = vector.broadcast %350 : vector<1x128xf32> to vector<16x128xf32>
    %352 = arith.mulf %349, %351 : vector<16x128xf32>
    %353 = arith.addf %343, %352 : vector<16x128xf32>
    %354 = vector.extract_strided_slice %2 {offsets = [0, 22], sizes = [16, 1], strides = [1, 1]} : vector<16x44xf32> to vector<16x1xf32>
    %355 = vector.extract_strided_slice %4 {offsets = [22, 0], sizes = [1, 128], strides = [1, 1]} : vector<44x128xf32> to vector<1x128xf32>
    %356 = vector.broadcast %354 : vector<16x1xf32> to vector<16x128xf32>
    %357 = vector.broadcast %355 : vector<1x128xf32> to vector<16x128xf32>
    %358 = arith.subf %356, %357 : vector<16x128xf32>
    %359 = math.absf %358 : vector<16x128xf32>
    %360 = vector.extract_strided_slice %5 {offsets = [22, 0], sizes = [1, 128], strides = [1, 1]} : vector<44x128xf32> to vector<1x128xf32>
    %361 = vector.broadcast %360 : vector<1x128xf32> to vector<16x128xf32>
    %362 = arith.mulf %359, %361 : vector<16x128xf32>
    %363 = arith.addf %353, %362 : vector<16x128xf32>
    %364 = vector.extract_strided_slice %2 {offsets = [0, 23], sizes = [16, 1], strides = [1, 1]} : vector<16x44xf32> to vector<16x1xf32>
    %365 = vector.extract_strided_slice %4 {offsets = [23, 0], sizes = [1, 128], strides = [1, 1]} : vector<44x128xf32> to vector<1x128xf32>
    %366 = vector.broadcast %364 : vector<16x1xf32> to vector<16x128xf32>
    %367 = vector.broadcast %365 : vector<1x128xf32> to vector<16x128xf32>
    %368 = arith.subf %366, %367 : vector<16x128xf32>
    %369 = math.absf %368 : vector<16x128xf32>
    %370 = vector.extract_strided_slice %5 {offsets = [23, 0], sizes = [1, 128], strides = [1, 1]} : vector<44x128xf32> to vector<1x128xf32>
    %371 = vector.broadcast %370 : vector<1x128xf32> to vector<16x128xf32>
    %372 = arith.mulf %369, %371 : vector<16x128xf32>
    %373 = arith.addf %363, %372 : vector<16x128xf32>
    %374 = vector.extract_strided_slice %2 {offsets = [0, 24], sizes = [16, 1], strides = [1, 1]} : vector<16x44xf32> to vector<16x1xf32>
    %375 = vector.extract_strided_slice %4 {offsets = [24, 0], sizes = [1, 128], strides = [1, 1]} : vector<44x128xf32> to vector<1x128xf32>
    %376 = vector.broadcast %374 : vector<16x1xf32> to vector<16x128xf32>
    %377 = vector.broadcast %375 : vector<1x128xf32> to vector<16x128xf32>
    %378 = arith.subf %376, %377 : vector<16x128xf32>
    %379 = math.absf %378 : vector<16x128xf32>
    %380 = vector.extract_strided_slice %5 {offsets = [24, 0], sizes = [1, 128], strides = [1, 1]} : vector<44x128xf32> to vector<1x128xf32>
    %381 = vector.broadcast %380 : vector<1x128xf32> to vector<16x128xf32>
    %382 = arith.mulf %379, %381 : vector<16x128xf32>
    %383 = arith.addf %373, %382 : vector<16x128xf32>
    %384 = vector.extract_strided_slice %2 {offsets = [0, 25], sizes = [16, 1], strides = [1, 1]} : vector<16x44xf32> to vector<16x1xf32>
    %385 = vector.extract_strided_slice %4 {offsets = [25, 0], sizes = [1, 128], strides = [1, 1]} : vector<44x128xf32> to vector<1x128xf32>
    %386 = vector.broadcast %384 : vector<16x1xf32> to vector<16x128xf32>
    %387 = vector.broadcast %385 : vector<1x128xf32> to vector<16x128xf32>
    %388 = arith.subf %386, %387 : vector<16x128xf32>
    %389 = math.absf %388 : vector<16x128xf32>
    %390 = vector.extract_strided_slice %5 {offsets = [25, 0], sizes = [1, 128], strides = [1, 1]} : vector<44x128xf32> to vector<1x128xf32>
    %391 = vector.broadcast %390 : vector<1x128xf32> to vector<16x128xf32>
    %392 = arith.mulf %389, %391 : vector<16x128xf32>
    %393 = arith.addf %383, %392 : vector<16x128xf32>
    %394 = vector.extract_strided_slice %2 {offsets = [0, 26], sizes = [16, 1], strides = [1, 1]} : vector<16x44xf32> to vector<16x1xf32>
    %395 = vector.extract_strided_slice %4 {offsets = [26, 0], sizes = [1, 128], strides = [1, 1]} : vector<44x128xf32> to vector<1x128xf32>
    %396 = vector.broadcast %394 : vector<16x1xf32> to vector<16x128xf32>
    %397 = vector.broadcast %395 : vector<1x128xf32> to vector<16x128xf32>
    %398 = arith.subf %396, %397 : vector<16x128xf32>
    %399 = math.absf %398 : vector<16x128xf32>
    %400 = vector.extract_strided_slice %5 {offsets = [26, 0], sizes = [1, 128], strides = [1, 1]} : vector<44x128xf32> to vector<1x128xf32>
    %401 = vector.broadcast %400 : vector<1x128xf32> to vector<16x128xf32>
    %402 = arith.mulf %399, %401 : vector<16x128xf32>
    %403 = arith.addf %393, %402 : vector<16x128xf32>
    %404 = vector.extract_strided_slice %2 {offsets = [0, 27], sizes = [16, 1], strides = [1, 1]} : vector<16x44xf32> to vector<16x1xf32>
    %405 = vector.extract_strided_slice %4 {offsets = [27, 0], sizes = [1, 128], strides = [1, 1]} : vector<44x128xf32> to vector<1x128xf32>
    %406 = vector.broadcast %404 : vector<16x1xf32> to vector<16x128xf32>
    %407 = vector.broadcast %405 : vector<1x128xf32> to vector<16x128xf32>
    %408 = arith.subf %406, %407 : vector<16x128xf32>
    %409 = math.absf %408 : vector<16x128xf32>
    %410 = vector.extract_strided_slice %5 {offsets = [27, 0], sizes = [1, 128], strides = [1, 1]} : vector<44x128xf32> to vector<1x128xf32>
    %411 = vector.broadcast %410 : vector<1x128xf32> to vector<16x128xf32>
    %412 = arith.mulf %409, %411 : vector<16x128xf32>
    %413 = arith.addf %403, %412 : vector<16x128xf32>
    %414 = vector.extract_strided_slice %2 {offsets = [0, 28], sizes = [16, 1], strides = [1, 1]} : vector<16x44xf32> to vector<16x1xf32>
    %415 = vector.extract_strided_slice %4 {offsets = [28, 0], sizes = [1, 128], strides = [1, 1]} : vector<44x128xf32> to vector<1x128xf32>
    %416 = vector.broadcast %414 : vector<16x1xf32> to vector<16x128xf32>
    %417 = vector.broadcast %415 : vector<1x128xf32> to vector<16x128xf32>
    %418 = arith.subf %416, %417 : vector<16x128xf32>
    %419 = math.absf %418 : vector<16x128xf32>
    %420 = vector.extract_strided_slice %5 {offsets = [28, 0], sizes = [1, 128], strides = [1, 1]} : vector<44x128xf32> to vector<1x128xf32>
    %421 = vector.broadcast %420 : vector<1x128xf32> to vector<16x128xf32>
    %422 = arith.mulf %419, %421 : vector<16x128xf32>
    %423 = arith.addf %413, %422 : vector<16x128xf32>
    %424 = vector.extract_strided_slice %2 {offsets = [0, 29], sizes = [16, 1], strides = [1, 1]} : vector<16x44xf32> to vector<16x1xf32>
    %425 = vector.extract_strided_slice %4 {offsets = [29, 0], sizes = [1, 128], strides = [1, 1]} : vector<44x128xf32> to vector<1x128xf32>
    %426 = vector.broadcast %424 : vector<16x1xf32> to vector<16x128xf32>
    %427 = vector.broadcast %425 : vector<1x128xf32> to vector<16x128xf32>
    %428 = arith.subf %426, %427 : vector<16x128xf32>
    %429 = math.absf %428 : vector<16x128xf32>
    %430 = vector.extract_strided_slice %5 {offsets = [29, 0], sizes = [1, 128], strides = [1, 1]} : vector<44x128xf32> to vector<1x128xf32>
    %431 = vector.broadcast %430 : vector<1x128xf32> to vector<16x128xf32>
    %432 = arith.mulf %429, %431 : vector<16x128xf32>
    %433 = arith.addf %423, %432 : vector<16x128xf32>
    %434 = vector.extract_strided_slice %2 {offsets = [0, 30], sizes = [16, 1], strides = [1, 1]} : vector<16x44xf32> to vector<16x1xf32>
    %435 = vector.extract_strided_slice %4 {offsets = [30, 0], sizes = [1, 128], strides = [1, 1]} : vector<44x128xf32> to vector<1x128xf32>
    %436 = vector.broadcast %434 : vector<16x1xf32> to vector<16x128xf32>
    %437 = vector.broadcast %435 : vector<1x128xf32> to vector<16x128xf32>
    %438 = arith.subf %436, %437 : vector<16x128xf32>
    %439 = math.absf %438 : vector<16x128xf32>
    %440 = vector.extract_strided_slice %5 {offsets = [30, 0], sizes = [1, 128], strides = [1, 1]} : vector<44x128xf32> to vector<1x128xf32>
    %441 = vector.broadcast %440 : vector<1x128xf32> to vector<16x128xf32>
    %442 = arith.mulf %439, %441 : vector<16x128xf32>
    %443 = arith.addf %433, %442 : vector<16x128xf32>
    %444 = vector.extract_strided_slice %2 {offsets = [0, 31], sizes = [16, 1], strides = [1, 1]} : vector<16x44xf32> to vector<16x1xf32>
    %445 = vector.extract_strided_slice %4 {offsets = [31, 0], sizes = [1, 128], strides = [1, 1]} : vector<44x128xf32> to vector<1x128xf32>
    %446 = vector.broadcast %444 : vector<16x1xf32> to vector<16x128xf32>
    %447 = vector.broadcast %445 : vector<1x128xf32> to vector<16x128xf32>
    %448 = arith.subf %446, %447 : vector<16x128xf32>
    %449 = math.absf %448 : vector<16x128xf32>
    %450 = vector.extract_strided_slice %5 {offsets = [31, 0], sizes = [1, 128], strides = [1, 1]} : vector<44x128xf32> to vector<1x128xf32>
    %451 = vector.broadcast %450 : vector<1x128xf32> to vector<16x128xf32>
    %452 = arith.mulf %449, %451 : vector<16x128xf32>
    %453 = arith.addf %443, %452 : vector<16x128xf32>
    %454 = vector.extract_strided_slice %2 {offsets = [0, 32], sizes = [16, 1], strides = [1, 1]} : vector<16x44xf32> to vector<16x1xf32>
    %455 = vector.extract_strided_slice %4 {offsets = [32, 0], sizes = [1, 128], strides = [1, 1]} : vector<44x128xf32> to vector<1x128xf32>
    %456 = vector.broadcast %454 : vector<16x1xf32> to vector<16x128xf32>
    %457 = vector.broadcast %455 : vector<1x128xf32> to vector<16x128xf32>
    %458 = arith.subf %456, %457 : vector<16x128xf32>
    %459 = math.absf %458 : vector<16x128xf32>
    %460 = vector.extract_strided_slice %5 {offsets = [32, 0], sizes = [1, 128], strides = [1, 1]} : vector<44x128xf32> to vector<1x128xf32>
    %461 = vector.broadcast %460 : vector<1x128xf32> to vector<16x128xf32>
    %462 = arith.mulf %459, %461 : vector<16x128xf32>
    %463 = arith.addf %453, %462 : vector<16x128xf32>
    %464 = vector.extract_strided_slice %2 {offsets = [0, 33], sizes = [16, 1], strides = [1, 1]} : vector<16x44xf32> to vector<16x1xf32>
    %465 = vector.extract_strided_slice %4 {offsets = [33, 0], sizes = [1, 128], strides = [1, 1]} : vector<44x128xf32> to vector<1x128xf32>
    %466 = vector.broadcast %464 : vector<16x1xf32> to vector<16x128xf32>
    %467 = vector.broadcast %465 : vector<1x128xf32> to vector<16x128xf32>
    %468 = arith.subf %466, %467 : vector<16x128xf32>
    %469 = math.absf %468 : vector<16x128xf32>
    %470 = vector.extract_strided_slice %5 {offsets = [33, 0], sizes = [1, 128], strides = [1, 1]} : vector<44x128xf32> to vector<1x128xf32>
    %471 = vector.broadcast %470 : vector<1x128xf32> to vector<16x128xf32>
    %472 = arith.mulf %469, %471 : vector<16x128xf32>
    %473 = arith.addf %463, %472 : vector<16x128xf32>
    %474 = vector.extract_strided_slice %2 {offsets = [0, 34], sizes = [16, 1], strides = [1, 1]} : vector<16x44xf32> to vector<16x1xf32>
    %475 = vector.extract_strided_slice %4 {offsets = [34, 0], sizes = [1, 128], strides = [1, 1]} : vector<44x128xf32> to vector<1x128xf32>
    %476 = vector.broadcast %474 : vector<16x1xf32> to vector<16x128xf32>
    %477 = vector.broadcast %475 : vector<1x128xf32> to vector<16x128xf32>
    %478 = arith.subf %476, %477 : vector<16x128xf32>
    %479 = math.absf %478 : vector<16x128xf32>
    %480 = vector.extract_strided_slice %5 {offsets = [34, 0], sizes = [1, 128], strides = [1, 1]} : vector<44x128xf32> to vector<1x128xf32>
    %481 = vector.broadcast %480 : vector<1x128xf32> to vector<16x128xf32>
    %482 = arith.mulf %479, %481 : vector<16x128xf32>
    %483 = arith.addf %473, %482 : vector<16x128xf32>
    %484 = vector.extract_strided_slice %2 {offsets = [0, 35], sizes = [16, 1], strides = [1, 1]} : vector<16x44xf32> to vector<16x1xf32>
    %485 = vector.extract_strided_slice %4 {offsets = [35, 0], sizes = [1, 128], strides = [1, 1]} : vector<44x128xf32> to vector<1x128xf32>
    %486 = vector.broadcast %484 : vector<16x1xf32> to vector<16x128xf32>
    %487 = vector.broadcast %485 : vector<1x128xf32> to vector<16x128xf32>
    %488 = arith.subf %486, %487 : vector<16x128xf32>
    %489 = math.absf %488 : vector<16x128xf32>
    %490 = vector.extract_strided_slice %5 {offsets = [35, 0], sizes = [1, 128], strides = [1, 1]} : vector<44x128xf32> to vector<1x128xf32>
    %491 = vector.broadcast %490 : vector<1x128xf32> to vector<16x128xf32>
    %492 = arith.mulf %489, %491 : vector<16x128xf32>
    %493 = arith.addf %483, %492 : vector<16x128xf32>
    %494 = vector.extract_strided_slice %2 {offsets = [0, 36], sizes = [16, 1], strides = [1, 1]} : vector<16x44xf32> to vector<16x1xf32>
    %495 = vector.extract_strided_slice %4 {offsets = [36, 0], sizes = [1, 128], strides = [1, 1]} : vector<44x128xf32> to vector<1x128xf32>
    %496 = vector.broadcast %494 : vector<16x1xf32> to vector<16x128xf32>
    %497 = vector.broadcast %495 : vector<1x128xf32> to vector<16x128xf32>
    %498 = arith.subf %496, %497 : vector<16x128xf32>
    %499 = math.absf %498 : vector<16x128xf32>
    %500 = vector.extract_strided_slice %5 {offsets = [36, 0], sizes = [1, 128], strides = [1, 1]} : vector<44x128xf32> to vector<1x128xf32>
    %501 = vector.broadcast %500 : vector<1x128xf32> to vector<16x128xf32>
    %502 = arith.mulf %499, %501 : vector<16x128xf32>
    %503 = arith.addf %493, %502 : vector<16x128xf32>
    %504 = vector.extract_strided_slice %2 {offsets = [0, 37], sizes = [16, 1], strides = [1, 1]} : vector<16x44xf32> to vector<16x1xf32>
    %505 = vector.extract_strided_slice %4 {offsets = [37, 0], sizes = [1, 128], strides = [1, 1]} : vector<44x128xf32> to vector<1x128xf32>
    %506 = vector.broadcast %504 : vector<16x1xf32> to vector<16x128xf32>
    %507 = vector.broadcast %505 : vector<1x128xf32> to vector<16x128xf32>
    %508 = arith.subf %506, %507 : vector<16x128xf32>
    %509 = math.absf %508 : vector<16x128xf32>
    %510 = vector.extract_strided_slice %5 {offsets = [37, 0], sizes = [1, 128], strides = [1, 1]} : vector<44x128xf32> to vector<1x128xf32>
    %511 = vector.broadcast %510 : vector<1x128xf32> to vector<16x128xf32>
    %512 = arith.mulf %509, %511 : vector<16x128xf32>
    %513 = arith.addf %503, %512 : vector<16x128xf32>
    %514 = vector.extract_strided_slice %2 {offsets = [0, 38], sizes = [16, 1], strides = [1, 1]} : vector<16x44xf32> to vector<16x1xf32>
    %515 = vector.extract_strided_slice %4 {offsets = [38, 0], sizes = [1, 128], strides = [1, 1]} : vector<44x128xf32> to vector<1x128xf32>
    %516 = vector.broadcast %514 : vector<16x1xf32> to vector<16x128xf32>
    %517 = vector.broadcast %515 : vector<1x128xf32> to vector<16x128xf32>
    %518 = arith.subf %516, %517 : vector<16x128xf32>
    %519 = math.absf %518 : vector<16x128xf32>
    %520 = vector.extract_strided_slice %5 {offsets = [38, 0], sizes = [1, 128], strides = [1, 1]} : vector<44x128xf32> to vector<1x128xf32>
    %521 = vector.broadcast %520 : vector<1x128xf32> to vector<16x128xf32>
    %522 = arith.mulf %519, %521 : vector<16x128xf32>
    %523 = arith.addf %513, %522 : vector<16x128xf32>
    %524 = vector.extract_strided_slice %2 {offsets = [0, 39], sizes = [16, 1], strides = [1, 1]} : vector<16x44xf32> to vector<16x1xf32>
    %525 = vector.extract_strided_slice %4 {offsets = [39, 0], sizes = [1, 128], strides = [1, 1]} : vector<44x128xf32> to vector<1x128xf32>
    %526 = vector.broadcast %524 : vector<16x1xf32> to vector<16x128xf32>
    %527 = vector.broadcast %525 : vector<1x128xf32> to vector<16x128xf32>
    %528 = arith.subf %526, %527 : vector<16x128xf32>
    %529 = math.absf %528 : vector<16x128xf32>
    %530 = vector.extract_strided_slice %5 {offsets = [39, 0], sizes = [1, 128], strides = [1, 1]} : vector<44x128xf32> to vector<1x128xf32>
    %531 = vector.broadcast %530 : vector<1x128xf32> to vector<16x128xf32>
    %532 = arith.mulf %529, %531 : vector<16x128xf32>
    %533 = arith.addf %523, %532 : vector<16x128xf32>
    %534 = vector.extract_strided_slice %2 {offsets = [0, 40], sizes = [16, 1], strides = [1, 1]} : vector<16x44xf32> to vector<16x1xf32>
    %535 = vector.extract_strided_slice %4 {offsets = [40, 0], sizes = [1, 128], strides = [1, 1]} : vector<44x128xf32> to vector<1x128xf32>
    %536 = vector.broadcast %534 : vector<16x1xf32> to vector<16x128xf32>
    %537 = vector.broadcast %535 : vector<1x128xf32> to vector<16x128xf32>
    %538 = arith.subf %536, %537 : vector<16x128xf32>
    %539 = math.absf %538 : vector<16x128xf32>
    %540 = vector.extract_strided_slice %5 {offsets = [40, 0], sizes = [1, 128], strides = [1, 1]} : vector<44x128xf32> to vector<1x128xf32>
    %541 = vector.broadcast %540 : vector<1x128xf32> to vector<16x128xf32>
    %542 = arith.mulf %539, %541 : vector<16x128xf32>
    %543 = arith.addf %533, %542 : vector<16x128xf32>
    %544 = vector.extract_strided_slice %2 {offsets = [0, 41], sizes = [16, 1], strides = [1, 1]} : vector<16x44xf32> to vector<16x1xf32>
    %545 = vector.extract_strided_slice %4 {offsets = [41, 0], sizes = [1, 128], strides = [1, 1]} : vector<44x128xf32> to vector<1x128xf32>
    %546 = vector.broadcast %544 : vector<16x1xf32> to vector<16x128xf32>
    %547 = vector.broadcast %545 : vector<1x128xf32> to vector<16x128xf32>
    %548 = arith.subf %546, %547 : vector<16x128xf32>
    %549 = math.absf %548 : vector<16x128xf32>
    %550 = vector.extract_strided_slice %5 {offsets = [41, 0], sizes = [1, 128], strides = [1, 1]} : vector<44x128xf32> to vector<1x128xf32>
    %551 = vector.broadcast %550 : vector<1x128xf32> to vector<16x128xf32>
    %552 = arith.mulf %549, %551 : vector<16x128xf32>
    %553 = arith.addf %543, %552 : vector<16x128xf32>
    %554 = vector.extract_strided_slice %2 {offsets = [0, 42], sizes = [16, 1], strides = [1, 1]} : vector<16x44xf32> to vector<16x1xf32>
    %555 = vector.extract_strided_slice %4 {offsets = [42, 0], sizes = [1, 128], strides = [1, 1]} : vector<44x128xf32> to vector<1x128xf32>
    %556 = vector.broadcast %554 : vector<16x1xf32> to vector<16x128xf32>
    %557 = vector.broadcast %555 : vector<1x128xf32> to vector<16x128xf32>
    %558 = arith.subf %556, %557 : vector<16x128xf32>
    %559 = math.absf %558 : vector<16x128xf32>
    %560 = vector.extract_strided_slice %5 {offsets = [42, 0], sizes = [1, 128], strides = [1, 1]} : vector<44x128xf32> to vector<1x128xf32>
    %561 = vector.broadcast %560 : vector<1x128xf32> to vector<16x128xf32>
    %562 = arith.mulf %559, %561 : vector<16x128xf32>
    %563 = arith.addf %553, %562 : vector<16x128xf32>
    %564 = vector.extract_strided_slice %2 {offsets = [0, 43], sizes = [16, 1], strides = [1, 1]} : vector<16x44xf32> to vector<16x1xf32>
    %565 = vector.extract_strided_slice %4 {offsets = [43, 0], sizes = [1, 128], strides = [1, 1]} : vector<44x128xf32> to vector<1x128xf32>
    %566 = vector.broadcast %564 : vector<16x1xf32> to vector<16x128xf32>
    %567 = vector.broadcast %565 : vector<1x128xf32> to vector<16x128xf32>
    %568 = arith.subf %566, %567 : vector<16x128xf32>
    %569 = math.absf %568 : vector<16x128xf32>
    %570 = vector.extract_strided_slice %5 {offsets = [43, 0], sizes = [1, 128], strides = [1, 1]} : vector<44x128xf32> to vector<1x128xf32>
    %571 = vector.broadcast %570 : vector<1x128xf32> to vector<16x128xf32>
    %572 = arith.mulf %569, %571 : vector<16x128xf32>
    %573 = arith.addf %563, %572 : vector<16x128xf32>
    %cst_32 = arith.constant 1.000000e+00 : f32
    %574 = vector.broadcast %cst_32 : f32 to vector<16x128xf32>
    %575 = arith.mulf %574, %43 : vector<16x128xf32>
    %576 = vector.broadcast %16 : vector<16x1xf32> to vector<16x128xf32>
    %577 = arith.addf %576, %575 : vector<16x128xf32>
    %cst_33 = arith.constant 1.000000e+00 : f32
    %578 = vector.broadcast %cst_33 : f32 to vector<16x128xf32>
    %579 = arith.mulf %578, %125 : vector<16x128xf32>
    %580 = arith.subf %577, %579 : vector<16x128xf32>
    %581 = vector.broadcast %132 : vector<1x128xf32> to vector<16x128xf32>
    %582 = arith.mulf %573, %581 : vector<16x128xf32>
    %583 = arith.addf %580, %582 : vector<16x128xf32>
    %c0_34 = arith.constant 0 : index
    %c0_35 = arith.constant 0 : index
    %584 = vector.load %arg7[%c0_34, %c0_35] : memref<16x128xf32, #tpu.memory_space<vmem>>, vector<16x128xf32>
    tpu.vector_store %arg7[%c0_34, %c0_35], %583 {strides = array<i32>} : memref<16x128xf32, #tpu.memory_space<vmem>>, vector<16x128xf32>,
    return
  }
  func.func @transform_0(%arg0: i32) -> (i32, i32) {
    %c0_i32 = arith.constant 0 : i32
    %c0_i32_0 = arith.constant 0 : i32
    return %arg0, %c0_i32 : i32, i32
  }
  func.func @transform_1(%arg0: i32) -> (i32, i32) {
    %c0_i32 = arith.constant 0 : i32
    %c0_i32_0 = arith.constant 0 : i32
    return %arg0, %c0_i32 : i32, i32
  }
  func.func @transform_2(%arg0: i32) -> (i32, i32) {
    %c0_i32 = arith.constant 0 : i32
    %c0_i32_0 = arith.constant 0 : i32
    return %arg0, %c0_i32 : i32, i32
  }
  func.func @transform_3(%arg0: i32) -> (i32, i32) {
    %c0_i32 = arith.constant 0 : i32
    %c0_i32_0 = arith.constant 0 : i32
    %c0_i32_1 = arith.constant 0 : i32
    return %c0_i32, %c0_i32_0 : i32, i32
  }
  func.func @transform_4(%arg0: i32) -> (i32, i32) {
    %c0_i32 = arith.constant 0 : i32
    %c0_i32_0 = arith.constant 0 : i32
    %c0_i32_1 = arith.constant 0 : i32
    return %c0_i32, %c0_i32_0 : i32, i32
  }
  func.func @transform_5(%arg0: i32) -> (i32, i32) {
    %c0_i32 = arith.constant 0 : i32
    %c0_i32_0 = arith.constant 0 : i32
    %c0_i32_1 = arith.constant 0 : i32
    return %c0_i32, %c0_i32_0 : i32, i32
  }
  func.func @transform_6(%arg0: i32) -> (i32, i32) {
    %c0_i32 = arith.constant 0 : i32
    %c0_i32_0 = arith.constant 0 : i32
    return %arg0, %c0_i32 : i32, i32
  }
}

</mosaic_0001>

<llo_original>
// kernel: tpu_custom_call.1
$region0: #{tpu_custom_call.1}
  #allocation0 [shape = 'u32[]', space=smem, size = 0x4, offset = 0x4, fixed_abs, tag = 'smem constant byte address 0x4 - core index']
  #allocation1 [shape = 'u32[144,128]{1,0:T(1,128)}', space=vmem, size = 0x12000, scoped, tag = 'internal scratch']
  %s0 = inlined_call_operand.vmem [shape: f32[16,1], index: 0, kind: input, shape index: {}]
  %s1 = inlined_call_operand.vmem [shape: f32[16,4], index: 1, kind: input, shape index: {}]
  %s2 = inlined_call_operand.vmem [shape: f32[16,44], index: 2, kind: input, shape index: {}]
  %s3 = inlined_call_operand.vmem [shape: f32[4,128], index: 3, kind: input, shape index: {}]
  %s4 = inlined_call_operand.hbm [shape: f32[44,128], index: 4, kind: input, shape index: {}]
  %s5 = inlined_call_operand.hbm [shape: f32[44,128], index: 5, kind: input, shape index: {}]
  %s6 = inlined_call_operand.hbm [shape: f32[16,128], index: 6, kind: output, shape index: {}]
  %s7 = sld [smem:[#allocation0]]
  $region42: #{tpu_custom_call.1} parent=0
    _
  %s9 = ssub.s32 1, %s7
  %s10 = scalar_select 0, %s9, %s7
  $region1: #{tpu_custom_call.1} parent=0
    #allocation2 [shape = 'u8[24576]{0}', space=vmem, size = 0x6000, scoped, tag = 'input window, operand 4, single buffered']
    #allocation3 [shape = 's32[1]{0}', space=sflag, size = 0x4, scoped, tag = 'scoped memory for tpu_custom_call.1']
    #allocation4 [shape = 's32[1]{0}', space=sflag, size = 0x4, scoped, tag = 'scoped memory for tpu_custom_call.1']
    #allocation5 [shape = 'u8[24576]{0}', space=vmem, size = 0x6000, scoped, tag = 'input window, operand 5, single buffered']
    #allocation6 [shape = 's32[1]{0}', space=sflag, size = 0x4, scoped, tag = 'scoped memory for tpu_custom_call.1']
    #allocation7 [shape = 'u8[8192]{0}', space=vmem, size = 0x2000, scoped, tag = 'output window, operand 0, single buffered']
    %11 = vsyncpa [#allocation3], 0
    %12 = vsyncpa [#allocation6], 0
    %13 = vsyncpa [#allocation4], 0
    // Predicated region
    $region2: #{tpu_custom_call.1} parent=1 // pred_check
      _
    $region3: #{tpu_custom_call.1} parent=1 // pred_check_branch
      %15 = sbr.rel (0) target = $region5
    $region4: #{tpu_custom_call.1} parent=1 // pred_region
      _
    $region5: #{tpu_custom_call.1} parent=1 // pred_fallthru
      _
    // Predicated region
    $region6: #{tpu_custom_call.1} parent=1 // pred_check
      _
    $region7: #{tpu_custom_call.1} parent=1 // pred_check_branch
      %17 = sbr.rel (0) target = $region9
    $region8: #{tpu_custom_call.1} parent=1 // pred_region
      _
    $region9: #{tpu_custom_call.1} parent=1 // pred_fallthru
      _
    // Predicated region
    $region10: #{tpu_custom_call.1} parent=1 // pred_check
      _
    $region11: #{tpu_custom_call.1} parent=1 // pred_check_branch
      %19 = sbr.rel (0) target = $region13
    $region12: #{tpu_custom_call.1} parent=1 // pred_region
      _
    $region13: #{tpu_custom_call.1} parent=1 // pred_fallthru
      _
    // Predicated region
    $region14: #{tpu_custom_call.1} parent=1 // pred_check
      _
    $region15: #{tpu_custom_call.1} parent=1 // pred_check_branch
      %21 = sbr.rel (0) target = $region17
    $region16: #{tpu_custom_call.1} parent=1 // pred_region
      _
    $region17: #{tpu_custom_call.1} parent=1 // pred_fallthru
      _
    // Predicated region
    $region18: #{tpu_custom_call.1} parent=1 // pred_check
      _
    $region19: #{tpu_custom_call.1} parent=1 // pred_check_branch
      %23 = sbr.rel (0) target = $region21
    $region20: #{tpu_custom_call.1} parent=1 // pred_region
      %s25 = ssub.s32 768, 768
      %26 = vsyncadd [#allocation3], %s25
      %s27 = sshll.u32 [#allocation2], 4
      %s28 = int_to_ptr.vmem [resolvable:$true] %s27
      %33 = dma.hbm_to_vmem [thread:$0]  %s4, 768, %s28, [#allocation3], 128, 128, 8
    $region21: #{tpu_custom_call.1} parent=1 // pred_fallthru
      _
    // Predicated region
    $region22: #{tpu_custom_call.1} parent=1 // pred_check
      _
    $region23: #{tpu_custom_call.1} parent=1 // pred_check_branch
      %35 = sbr.rel (0) target = $region25
    $region24: #{tpu_custom_call.1} parent=1 // pred_region
      %s37 = ssub.s32 768, 768
      %38 = vsyncadd [#allocation6], %s37
      %s39 = sshll.u32 [#allocation5], 4
      %s40 = int_to_ptr.vmem [resolvable:$true] %s39
      %45 = dma.hbm_to_vmem [thread:$0]  %s5, 768, %s40, [#allocation6], 128, 128, 8
    $region25: #{tpu_custom_call.1} parent=1 // pred_fallthru
      _
    // Predicated region
    $region26: #{tpu_custom_call.1} parent=1 // pred_check
      _
    $region27: #{tpu_custom_call.1} parent=1 // pred_check_branch
      %47 = sbr.rel (0) target = $region29
    $region28: #{tpu_custom_call.1} parent=1 // pred_region
      %48 = dma.done [#allocation3], 768
    $region29: #{tpu_custom_call.1} parent=1 // pred_fallthru
      _
    // Predicated region
    $region30: #{tpu_custom_call.1} parent=1 // pred_check
      _
    $region31: #{tpu_custom_call.1} parent=1 // pred_check_branch
      %50 = sbr.rel (0) target = $region33
    $region32: #{tpu_custom_call.1} parent=1 // pred_region
      %51 = dma.done [#allocation6], 768
    $region33: #{tpu_custom_call.1} parent=1 // pred_fallthru
      _
    %v52 = vld [vmem:[%s0] sm:$0xff]
    %v53 = vld [vmem:[%s0 + $0x8] sm:$0xff]
    %v54 = vld [vmem:[%s1] sm:$0xff]
    %v55 = vld [vmem:[%s1 + $0x8] sm:$0xff]
    %v56 = vld [vmem:[%s2] sm:$0xff]
    %v57 = vld [vmem:[%s2 + $0x8] sm:$0xff]
    %v58 = vld [vmem:[%s3] sm:$0xf]
    %v59 = vld [vmem:[#allocation2] sm:$0xff]
    %v60 = vld [vmem:[#allocation2 + $0x8] sm:$0xff]
    %v61 = vld [vmem:[#allocation2 + $0x10] sm:$0xff]
    %v62 = vld [vmem:[#allocation2 + $0x18] sm:$0xff]
    %v63 = vld [vmem:[#allocation2 + $0x20] sm:$0xff]
    %v64 = vld [vmem:[#allocation2 + $0x28] sm:$0xf]
    %v65 = vld [vmem:[#allocation5] sm:$0xff]
    %v66 = vld [vmem:[#allocation5 + $0x8] sm:$0xff]
    %v67 = vld [vmem:[#allocation5 + $0x10] sm:$0xff]
    %v68 = vld [vmem:[#allocation5 + $0x18] sm:$0xff]
    %v69 = vld [vmem:[#allocation5 + $0x20] sm:$0xff]
    %v70 = vld [vmem:[#allocation5 + $0x28] sm:$0xf]
    %v71 = vsub.f32 1.0, %v52
    %v72 = vsub.f32 1.0, %v53
    %v73 = vmul.f32 %v71, 0.25
    %v74 = vmul.f32 %v72, 0.25
    %v75 = vmul.f32 %v73, %v71
    %v76 = vmul.f32 %v74, %v72
    %v77 = vadd.f32 %v52, 1e-08
    %v78 = vadd.f32 %v53, 1e-08
    %v79 = vlog2.pop %v77
    %v80 = vmul.f32 %v79, 0.6931472
    %v81 = vlog2.pop %v78
    %v82 = vmul.f32 %v81, 0.6931472
    %v83 = vsub.f32 0.0, %v80
    %v84 = vsub.f32 0.0, %v82
    %v85 = vmul.f32 %v75, %v83
    %v86 = vmul.f32 %v76, %v84
    %88 = vset.pattern.permute.xlu0 0
    %89 = vperm.xlu0 %88, %v54
    %v90 = vpop.permute.xlu0 %89
    %93 = vset.pattern.permute.xlu0 0
    %94 = vperm.xlu0 %93, %v55
    %v95 = vpop.permute.xlu0 %94
    %v97 = vlaneseq
    %v98 = vshrl.u32 %v97, 7
    %v99 = vsub.s32 0, %v98
    %v100 = vrot.slane %v58, %v99
    %v101 = vsub.f32 %v90, %v100
    %v102 = vsub.f32 %v95, %v100
    %v103 = vand.u32 2147483647, %v101
    %v104 = vand.u32 2147483647, %v102
    %105 = vset.pattern.permute.xlu0 1
    %106 = vperm.xlu0 %105, %v54
    %v107 = vpop.permute.xlu0 %106
    %109 = vset.pattern.permute.xlu0 1
    %110 = vperm.xlu0 %109, %v55
    %v111 = vpop.permute.xlu0 %110
    %v113 = vlaneseq
    %v114 = vshrl.u32 %v113, 7
    %v115 = vsub.s32 1, %v114
    %v116 = vrot.slane %v58, %v115
    %v117 = vsub.f32 %v107, %v116
    %v118 = vsub.f32 %v111, %v116
    %v119 = vand.u32 2147483647, %v117
    %v120 = vand.u32 2147483647, %v118
    %v121 = vadd.f32 %v103, %v119
    %v122 = vadd.f32 %v104, %v120
    %123 = vset.pattern.permute.xlu0 2
    %124 = vperm.xlu0 %123, %v54
    %v125 = vpop.permute.xlu0 %124
    %127 = vset.pattern.permute.xlu0 2
    %128 = vperm.xlu0 %127, %v55
    %v129 = vpop.permute.xlu0 %128
    %v131 = vlaneseq
    %v132 = vshrl.u32 %v131, 7
    %v133 = vsub.s32 2, %v132
    %v134 = vrot.slane %v58, %v133
    %v135 = vsub.f32 %v125, %v134
    %v136 = vsub.f32 %v129, %v134
    %v137 = vand.u32 2147483647, %v135
    %v138 = vand.u32 2147483647, %v136
    %v139 = vadd.f32 %v121, %v137
    %v140 = vadd.f32 %v122, %v138
    %141 = vset.pattern.permute.xlu0 3
    %142 = vperm.xlu0 %141, %v54
    %v143 = vpop.permute.xlu0 %142
    %145 = vset.pattern.permute.xlu0 3
    %146 = vperm.xlu0 %145, %v55
    %v147 = vpop.permute.xlu0 %146
    %v149 = vlaneseq
    %v150 = vshrl.u32 %v149, 7
    %v151 = vsub.s32 3, %v150
    %v152 = vrot.slane %v58, %v151
    %v153 = vsub.f32 %v143, %v152
    %v154 = vsub.f32 %v147, %v152
    %v155 = vand.u32 2147483647, %v153
    %v156 = vand.u32 2147483647, %v154
    %v157 = vadd.f32 %v139, %v155
    %v158 = vadd.f32 %v140, %v156
    %v159 = vmul.f32 %v54, 0.5
    %v160 = vmul.f32 %v55, 0.5
    %163 = vrot.lane.b32.xlu0 %v159, 126
    %v164 = vpop.permute.xlu0 %163
    %165 = vrot.lane.b32.xlu0 %v160, 126
    %v166 = vpop.permute.xlu0 %165
    %v169 = vsub.f32 %v54, %v164
    %v170 = vsub.f32 %v55, %v166
    %v171 = vadd.f32 %v54, %v164
    %v172 = vadd.f32 %v55, %v166
    %v173 = vmul.f32 %v58, 0.5
    %v175 = vrot.slane %v173, 2
    %v177 = vsub.f32 %v58, %v175
    %v178 = vadd.f32 %v58, %v175
    %v179 = vsub.f32 %v171, %v169
    %v180 = vsub.f32 %v172, %v170
    %183 = vrot.lane.b32.xlu0 %v179, 127
    %v184 = vpop.permute.xlu0 %183
    %185 = vrot.lane.b32.xlu0 %v180, 127
    %v186 = vpop.permute.xlu0 %185
    %v189 = vmul.f32 %v179, %v184
    %v190 = vmul.f32 %v180, %v186
    %v191 = vsub.f32 %v178, %v177
    %v193 = vrot.slane %v191, 1
    %v195 = vmul.f32 %v191, %v193
    %197 = vset.pattern.permute.xlu0 0
    %198 = vperm.xlu0 %197, %v171
    %v199 = vpop.permute.xlu0 %198
    %202 = vset.pattern.permute.xlu0 0
    %203 = vperm.xlu0 %202, %v172
    %v204 = vpop.permute.xlu0 %203
    %v206 = vlaneseq
    %v207 = vshrl.u32 %v206, 7
    %v208 = vsub.s32 0, %v207
    %v209 = vrot.slane %v178, %v208
    %v210 = vmin.f32 %v199, %v209
    %v211 = vmin.f32 %v204, %v209
    %213 = vset.pattern.permute.xlu0 0
    %214 = vperm.xlu0 %213, %v169
    %v215 = vpop.permute.xlu0 %214
    %218 = vset.pattern.permute.xlu0 0
    %219 = vperm.xlu0 %218, %v170
    %v220 = vpop.permute.xlu0 %219
    %v222 = vlaneseq
    %v223 = vshrl.u32 %v222, 7
    %v224 = vsub.s32 0, %v223
    %v225 = vrot.slane %v177, %v224
    %v226 = vmax.f32 %v215, %v225
    %v227 = vmax.f32 %v220, %v225
    %v228 = vsub.f32 %v210, %v226
    %v229 = vsub.f32 %v211, %v227
    %v230 = vmax.f32 %v228, 0.0
    %v231 = vmax.f32 %v229, 0.0
    %232 = vset.pattern.permute.xlu0 1
    %233 = vperm.xlu0 %232, %v171
    %v234 = vpop.permute.xlu0 %233
    %236 = vset.pattern.permute.xlu0 1
    %237 = vperm.xlu0 %236, %v172
    %v238 = vpop.permute.xlu0 %237
    %v240 = vlaneseq
    %v241 = vshrl.u32 %v240, 7
    %v242 = vsub.s32 1, %v241
    %v243 = vrot.slane %v178, %v242
    %v244 = vmin.f32 %v234, %v243
    %v245 = vmin.f32 %v238, %v243
    %246 = vset.pattern.permute.xlu0 1
    %247 = vperm.xlu0 %246, %v169
    %v248 = vpop.permute.xlu0 %247
    %250 = vset.pattern.permute.xlu0 1
    %251 = vperm.xlu0 %250, %v170
    %v252 = vpop.permute.xlu0 %251
    %v254 = vlaneseq
    %v255 = vshrl.u32 %v254, 7
    %v256 = vsub.s32 1, %v255
    %v257 = vrot.slane %v177, %v256
    %v258 = vmax.f32 %v248, %v257
    %v259 = vmax.f32 %v252, %v257
    %v260 = vsub.f32 %v244, %v258
    %v261 = vsub.f32 %v245, %v259
    %v262 = vmax.f32 %v260, 0.0
    %v263 = vmax.f32 %v261, 0.0
    %v264 = vmul.f32 %v230, %v262
    %v265 = vmul.f32 %v231, %v263
    %267 = vset.pattern.permute.xlu0 0
    %268 = vperm.xlu0 %267, %v189
    %v269 = vpop.permute.xlu0 %268
    %272 = vset.pattern.permute.xlu0 0
    %273 = vperm.xlu0 %272, %v190
    %v274 = vpop.permute.xlu0 %273
    %v276 = vlaneseq
    %v277 = vshrl.u32 %v276, 7
    %v278 = vsub.s32 0, %v277
    %v279 = vrot.slane %v195, %v278
    %v280 = vadd.f32 %v269, %v279
    %v281 = vadd.f32 %v274, %v279
    %v282 = vsub.f32 %v280, %v264
    %v283 = vsub.f32 %v281, %v265
    %v284 = vadd.f32 %v282, 1e-08
    %v285 = vadd.f32 %v283, 1e-08
    %v286 = vrcp.pop %v284
    %v287 = vrcp.pop %v285
    %v288 = vmul.f32 %v264, %v286
    %v289 = vmul.f32 %v265, %v287
    %v290 = vmax.f32 %v199, %v209
    %v291 = vmax.f32 %v204, %v209
    %v292 = vmin.f32 %v215, %v225
    %v293 = vmin.f32 %v220, %v225
    %v294 = vsub.f32 %v290, %v292
    %v295 = vsub.f32 %v291, %v293
    %v296 = vmax.f32 %v294, 0.0
    %v297 = vmax.f32 %v295, 0.0
    %v298 = vmax.f32 %v234, %v243
    %v299 = vmax.f32 %v238, %v243
    %v300 = vmin.f32 %v248, %v257
    %v301 = vmin.f32 %v252, %v257
    %v302 = vsub.f32 %v298, %v300
    %v303 = vsub.f32 %v299, %v301
    %v304 = vmax.f32 %v302, 0.0
    %v305 = vmax.f32 %v303, 0.0
    %v306 = vmul.f32 %v296, %v304
    %v307 = vmul.f32 %v297, %v305
    %v308 = vsub.f32 %v306, %v282
    %v309 = vsub.f32 %v307, %v283
    %v310 = vadd.f32 %v306, 1e-08
    %v311 = vadd.f32 %v307, 1e-08
    %v312 = vrcp.pop %v310
    %v313 = vrcp.pop %v311
    %v314 = vmul.f32 %v308, %v312
    %v315 = vmul.f32 %v309, %v313
    %v316 = vsub.f32 %v288, %v314
    %v317 = vsub.f32 %v289, %v315
    %v318 = vadd.f32 %v65, %v66
    %v319 = vadd.f32 %v318, %v67
    %v320 = vadd.f32 %v319, %v68
    %v321 = vadd.f32 %v320, %v69
    %vm322 = vcmask 1043456
    %v323 = vsel %vm322, %v70, 0.0
    %v324 = vadd.f32 %v321, %v323
    %v325 = vrot.slane %v324, 4
    %v326 = vadd.f32 %v324, %v325
    %v327 = vrot.slane %v326, 2
    %v328 = vadd.f32 %v326, %v327
    %v329 = vrot.slane %v328, 1
    %v330 = vadd.f32 %v328, %v329
    %v331 = vmax.f32 %v330, 1e-06
    %v332 = vrcp.pop %v331
    %v333 = vmul.f32 %v332, 0.019305019
    %335 = vset.pattern.permute.xlu0 0
    %336 = vperm.xlu0 %335, %v56
    %v337 = vpop.permute.xlu0 %336
    %340 = vset.pattern.permute.xlu0 0
    %341 = vperm.xlu0 %340, %v57
    %v342 = vpop.permute.xlu0 %341
    %v344 = vlaneseq
    %v345 = vshrl.u32 %v344, 7
    %v346 = vsub.s32 0, %v345
    %v347 = vrot.slane %v59, %v346
    %v348 = vsub.f32 %v337, %v347
    %v349 = vsub.f32 %v342, %v347
    %v350 = vand.u32 2147483647, %v348
    %v351 = vand.u32 2147483647, %v349
    %v352 = vlaneseq
    %v353 = vshrl.u32 %v352, 7
    %v354 = vsub.s32 0, %v353
    %v355 = vrot.slane %v65, %v354
    %v356 = vmul.f32 %v350, %v355
    %v357 = vmul.f32 %v351, %v355
    %v358 = vadd.f32 %v356, 0.0
    %v359 = vadd.f32 %v357, 0.0
    %360 = vset.pattern.permute.xlu0 1
    %361 = vperm.xlu0 %360, %v56
    %v362 = vpop.permute.xlu0 %361
    %364 = vset.pattern.permute.xlu0 1
    %365 = vperm.xlu0 %364, %v57
    %v366 = vpop.permute.xlu0 %365
    %v368 = vlaneseq
    %v369 = vshrl.u32 %v368, 7
    %v370 = vsub.s32 1, %v369
    %v371 = vrot.slane %v59, %v370
    %v372 = vsub.f32 %v362, %v371
    %v373 = vsub.f32 %v366, %v371
    %v374 = vand.u32 2147483647, %v372
    %v375 = vand.u32 2147483647, %v373
    %v376 = vlaneseq
    %v377 = vshrl.u32 %v376, 7
    %v378 = vsub.s32 1, %v377
    %v379 = vrot.slane %v65, %v378
    %v380 = vmul.f32 %v374, %v379
    %v381 = vmul.f32 %v375, %v379
    %v382 = vadd.f32 %v358, %v380
    %v383 = vadd.f32 %v359, %v381
    %384 = vset.pattern.permute.xlu0 2
    %385 = vperm.xlu0 %384, %v56
    %v386 = vpop.permute.xlu0 %385
    %388 = vset.pattern.permute.xlu0 2
    %389 = vperm.xlu0 %388, %v57
    %v390 = vpop.permute.xlu0 %389
    %v392 = vlaneseq
    %v393 = vshrl.u32 %v392, 7
    %v394 = vsub.s32 2, %v393
    %v395 = vrot.slane %v59, %v394
    %v396 = vsub.f32 %v386, %v395
    %v397 = vsub.f32 %v390, %v395
    %v398 = vand.u32 2147483647, %v396
    %v399 = vand.u32 2147483647, %v397
    %v400 = vlaneseq
    %v401 = vshrl.u32 %v400, 7
    %v402 = vsub.s32 2, %v401
    %v403 = vrot.slane %v65, %v402
    %v404 = vmul.f32 %v398, %v403
    %v405 = vmul.f32 %v399, %v403
    %v406 = vadd.f32 %v382, %v404
    %v407 = vadd.f32 %v383, %v405
    %408 = vset.pattern.permute.xlu0 3
    %409 = vperm.xlu0 %408, %v56
    %v410 = vpop.permute.xlu0 %409
    %412 = vset.pattern.permute.xlu0 3
    %413 = vperm.xlu0 %412, %v57
    %v414 = vpop.permute.xlu0 %413
    %v416 = vlaneseq
    %v417 = vshrl.u32 %v416, 7
    %v418 = vsub.s32 3, %v417
    %v419 = vrot.slane %v59, %v418
    %v420 = vsub.f32 %v410, %v419
    %v421 = vsub.f32 %v414, %v419
    %v422 = vand.u32 2147483647, %v420
    %v423 = vand.u32 2147483647, %v421
    %v424 = vlaneseq
    %v425 = vshrl.u32 %v424, 7
    %v426 = vsub.s32 3, %v425
    %v427 = vrot.slane %v65, %v426
    %v428 = vmul.f32 %v422, %v427
    %v429 = vmul.f32 %v423, %v427
    %v430 = vadd.f32 %v406, %v428
    %v431 = vadd.f32 %v407, %v429
    %432 = vset.pattern.permute.xlu0 4
    %433 = vperm.xlu0 %432, %v56
    %v434 = vpop.permute.xlu0 %433
    %436 = vset.pattern.permute.xlu0 4
    %437 = vperm.xlu0 %436, %v57
    %v438 = vpop.permute.xlu0 %437
    %v440 = vlaneseq
    %v441 = vshrl.u32 %v440, 7
    %v442 = vsub.s32 4, %v441
    %v443 = vrot.slane %v59, %v442
    %v444 = vsub.f32 %v434, %v443
    %v445 = vsub.f32 %v438, %v443
    %v446 = vand.u32 2147483647, %v444
    %v447 = vand.u32 2147483647, %v445
    %v448 = vlaneseq
    %v449 = vshrl.u32 %v448, 7
    %v450 = vsub.s32 4, %v449
    %v451 = vrot.slane %v65, %v450
    %v452 = vmul.f32 %v446, %v451
    %v453 = vmul.f32 %v447, %v451
    %v454 = vadd.f32 %v430, %v452
    %v455 = vadd.f32 %v431, %v453
    %456 = vset.pattern.permute.xlu0 5
    %457 = vperm.xlu0 %456, %v56
    %v458 = vpop.permute.xlu0 %457
    %460 = vset.pattern.permute.xlu0 5
    %461 = vperm.xlu0 %460, %v57
    %v462 = vpop.permute.xlu0 %461
    %v464 = vlaneseq
    %v465 = vshrl.u32 %v464, 7
    %v466 = vsub.s32 5, %v465
    %v467 = vrot.slane %v59, %v466
    %v468 = vsub.f32 %v458, %v467
    %v469 = vsub.f32 %v462, %v467
    %v470 = vand.u32 2147483647, %v468
    %v471 = vand.u32 2147483647, %v469
    %v472 = vlaneseq
    %v473 = vshrl.u32 %v472, 7
    %v474 = vsub.s32 5, %v473
    %v475 = vrot.slane %v65, %v474
    %v476 = vmul.f32 %v470, %v475
    %v477 = vmul.f32 %v471, %v475
    %v478 = vadd.f32 %v454, %v476
    %v479 = vadd.f32 %v455, %v477
    %480 = vset.pattern.permute.xlu0 6
    %481 = vperm.xlu0 %480, %v56
    %v482 = vpop.permute.xlu0 %481
    %484 = vset.pattern.permute.xlu0 6
    %485 = vperm.xlu0 %484, %v57
    %v486 = vpop.permute.xlu0 %485
    %v488 = vlaneseq
    %v489 = vshrl.u32 %v488, 7
    %v490 = vsub.s32 6, %v489
    %v491 = vrot.slane %v59, %v490
    %v492 = vsub.f32 %v482, %v491
    %v493 = vsub.f32 %v486, %v491
    %v494 = vand.u32 2147483647, %v492
    %v495 = vand.u32 2147483647, %v493
    %v496 = vlaneseq
    %v497 = vshrl.u32 %v496, 7
    %v498 = vsub.s32 6, %v497
    %v499 = vrot.slane %v65, %v498
    %v500 = vmul.f32 %v494, %v499
    %v501 = vmul.f32 %v495, %v499
    %v502 = vadd.f32 %v478, %v500
    %v503 = vadd.f32 %v479, %v501
    %504 = vset.pattern.permute.xlu0 7
    %505 = vperm.xlu0 %504, %v56
    %v506 = vpop.permute.xlu0 %505
    %508 = vset.pattern.permute.xlu0 7
    %509 = vperm.xlu0 %508, %v57
    %v510 = vpop.permute.xlu0 %509
    %v512 = vlaneseq
    %v513 = vshrl.u32 %v512, 7
    %v514 = vsub.s32 7, %v513
    %v515 = vrot.slane %v59, %v514
    %v516 = vsub.f32 %v506, %v515
    %v517 = vsub.f32 %v510, %v515
    %v518 = vand.u32 2147483647, %v516
    %v519 = vand.u32 2147483647, %v517
    %v520 = vlaneseq
    %v521 = vshrl.u32 %v520, 7
    %v522 = vsub.s32 7, %v521
    %v523 = vrot.slane %v65, %v522
    %v524 = vmul.f32 %v518, %v523
    %v525 = vmul.f32 %v519, %v523
    %v526 = vadd.f32 %v502, %v524
    %v527 = vadd.f32 %v503, %v525
    %528 = vset.pattern.permute.xlu0 8
    %529 = vperm.xlu0 %528, %v56
    %v530 = vpop.permute.xlu0 %529
    %532 = vset.pattern.permute.xlu0 8
    %533 = vperm.xlu0 %532, %v57
    %v534 = vpop.permute.xlu0 %533
    %v536 = vlaneseq
    %v537 = vshrl.u32 %v536, 7
    %v538 = vsub.s32 0, %v537
    %v539 = vrot.slane %v60, %v538
    %v540 = vsub.f32 %v530, %v539
    %v541 = vsub.f32 %v534, %v539
    %v542 = vand.u32 2147483647, %v540
    %v543 = vand.u32 2147483647, %v541
    %v544 = vlaneseq
    %v545 = vshrl.u32 %v544, 7
    %v546 = vsub.s32 0, %v545
    %v547 = vrot.slane %v66, %v546
    %v548 = vmul.f32 %v542, %v547
    %v549 = vmul.f32 %v543, %v547
    %v550 = vadd.f32 %v526, %v548
    %v551 = vadd.f32 %v527, %v549
    %552 = vset.pattern.permute.xlu0 9
    %553 = vperm.xlu0 %552, %v56
    %v554 = vpop.permute.xlu0 %553
    %556 = vset.pattern.permute.xlu0 9
    %557 = vperm.xlu0 %556, %v57
    %v558 = vpop.permute.xlu0 %557
    %v560 = vlaneseq
    %v561 = vshrl.u32 %v560, 7
    %v562 = vsub.s32 1, %v561
    %v563 = vrot.slane %v60, %v562
    %v564 = vsub.f32 %v554, %v563
    %v565 = vsub.f32 %v558, %v563
    %v566 = vand.u32 2147483647, %v564
    %v567 = vand.u32 2147483647, %v565
    %v568 = vlaneseq
    %v569 = vshrl.u32 %v568, 7
    %v570 = vsub.s32 1, %v569
    %v571 = vrot.slane %v66, %v570
    %v572 = vmul.f32 %v566, %v571
    %v573 = vmul.f32 %v567, %v571
    %v574 = vadd.f32 %v550, %v572
    %v575 = vadd.f32 %v551, %v573
    %576 = vset.pattern.permute.xlu0 10
    %577 = vperm.xlu0 %576, %v56
    %v578 = vpop.permute.xlu0 %577
    %580 = vset.pattern.permute.xlu0 10
    %581 = vperm.xlu0 %580, %v57
    %v582 = vpop.permute.xlu0 %581
    %v584 = vlaneseq
    %v585 = vshrl.u32 %v584, 7
    %v586 = vsub.s32 2, %v585
    %v587 = vrot.slane %v60, %v586
    %v588 = vsub.f32 %v578, %v587
    %v589 = vsub.f32 %v582, %v587
    %v590 = vand.u32 2147483647, %v588
    %v591 = vand.u32 2147483647, %v589
    %v592 = vlaneseq
    %v593 = vshrl.u32 %v592, 7
    %v594 = vsub.s32 2, %v593
    %v595 = vrot.slane %v66, %v594
    %v596 = vmul.f32 %v590, %v595
    %v597 = vmul.f32 %v591, %v595
    %v598 = vadd.f32 %v574, %v596
    %v599 = vadd.f32 %v575, %v597
    %600 = vset.pattern.permute.xlu0 11
    %601 = vperm.xlu0 %600, %v56
    %v602 = vpop.permute.xlu0 %601
    %604 = vset.pattern.permute.xlu0 11
    %605 = vperm.xlu0 %604, %v57
    %v606 = vpop.permute.xlu0 %605
    %v608 = vlaneseq
    %v609 = vshrl.u32 %v608, 7
    %v610 = vsub.s32 3, %v609
    %v611 = vrot.slane %v60, %v610
    %v612 = vsub.f32 %v602, %v611
    %v613 = vsub.f32 %v606, %v611
    %v614 = vand.u32 2147483647, %v612
    %v615 = vand.u32 2147483647, %v613
    %v616 = vlaneseq
    %v617 = vshrl.u32 %v616, 7
    %v618 = vsub.s32 3, %v617
    %v619 = vrot.slane %v66, %v618
    %v620 = vmul.f32 %v614, %v619
    %v621 = vmul.f32 %v615, %v619
    %v622 = vadd.f32 %v598, %v620
    %v623 = vadd.f32 %v599, %v621
    %624 = vset.pattern.permute.xlu0 12
    %625 = vperm.xlu0 %624, %v56
    %v626 = vpop.permute.xlu0 %625
    %628 = vset.pattern.permute.xlu0 12
    %629 = vperm.xlu0 %628, %v57
    %v630 = vpop.permute.xlu0 %629
    %v632 = vlaneseq
    %v633 = vshrl.u32 %v632, 7
    %v634 = vsub.s32 4, %v633
    %v635 = vrot.slane %v60, %v634
    %v636 = vsub.f32 %v626, %v635
    %v637 = vsub.f32 %v630, %v635
    %v638 = vand.u32 2147483647, %v636
    %v639 = vand.u32 2147483647, %v637
    %v640 = vlaneseq
    %v641 = vshrl.u32 %v640, 7
    %v642 = vsub.s32 4, %v641
    %v643 = vrot.slane %v66, %v642
    %v644 = vmul.f32 %v638, %v643
    %v645 = vmul.f32 %v639, %v643
    %v646 = vadd.f32 %v622, %v644
    %v647 = vadd.f32 %v623, %v645
    %648 = vset.pattern.permute.xlu0 13
    %649 = vperm.xlu0 %648, %v56
    %v650 = vpop.permute.xlu0 %649
    %652 = vset.pattern.permute.xlu0 13
    %653 = vperm.xlu0 %652, %v57
    %v654 = vpop.permute.xlu0 %653
    %v656 = vlaneseq
    %v657 = vshrl.u32 %v656, 7
    %v658 = vsub.s32 5, %v657
    %v659 = vrot.slane %v60, %v658
    %v660 = vsub.f32 %v650, %v659
    %v661 = vsub.f32 %v654, %v659
    %v662 = vand.u32 2147483647, %v660
    %v663 = vand.u32 2147483647, %v661
    %v664 = vlaneseq
    %v665 = vshrl.u32 %v664, 7
    %v666 = vsub.s32 5, %v665
    %v667 = vrot.slane %v66, %v666
    %v668 = vmul.f32 %v662, %v667
    %v669 = vmul.f32 %v663, %v667
    %v670 = vadd.f32 %v646, %v668
    %v671 = vadd.f32 %v647, %v669
    %672 = vset.pattern.permute.xlu0 14
    %673 = vperm.xlu0 %672, %v56
    %v674 = vpop.permute.xlu0 %673
    %676 = vset.pattern.permute.xlu0 14
    %677 = vperm.xlu0 %676, %v57
    %v678 = vpop.permute.xlu0 %677
    %v680 = vlaneseq
    %v681 = vshrl.u32 %v680, 7
    %v682 = vsub.s32 6, %v681
    %v683 = vrot.slane %v60, %v682
    %v684 = vsub.f32 %v674, %v683
    %v685 = vsub.f32 %v678, %v683
    %v686 = vand.u32 2147483647, %v684
    %v687 = vand.u32 2147483647, %v685
    %v688 = vlaneseq
    %v689 = vshrl.u32 %v688, 7
    %v690 = vsub.s32 6, %v689
    %v691 = vrot.slane %v66, %v690
    %v692 = vmul.f32 %v686, %v691
    %v693 = vmul.f32 %v687, %v691
    %v694 = vadd.f32 %v670, %v692
    %v695 = vadd.f32 %v671, %v693
    %696 = vset.pattern.permute.xlu0 15
    %697 = vperm.xlu0 %696, %v56
    %v698 = vpop.permute.xlu0 %697
    %700 = vset.pattern.permute.xlu0 15
    %701 = vperm.xlu0 %700, %v57
    %v702 = vpop.permute.xlu0 %701
    %v704 = vlaneseq
    %v705 = vshrl.u32 %v704, 7
    %v706 = vsub.s32 7, %v705
    %v707 = vrot.slane %v60, %v706
    %v708 = vsub.f32 %v698, %v707
    %v709 = vsub.f32 %v702, %v707
    %v710 = vand.u32 2147483647, %v708
    %v711 = vand.u32 2147483647, %v709
    %v712 = vlaneseq
    %v713 = vshrl.u32 %v712, 7
    %v714 = vsub.s32 7, %v713
    %v715 = vrot.slane %v66, %v714
    %v716 = vmul.f32 %v710, %v715
    %v717 = vmul.f32 %v711, %v715
    %v718 = vadd.f32 %v694, %v716
    %v719 = vadd.f32 %v695, %v717
    %720 = vset.pattern.permute.xlu0 16
    %721 = vperm.xlu0 %720, %v56
    %v722 = vpop.permute.xlu0 %721
    %724 = vset.pattern.permute.xlu0 16
    %725 = vperm.xlu0 %724, %v57
    %v726 = vpop.permute.xlu0 %725
    %v728 = vlaneseq
    %v729 = vshrl.u32 %v728, 7
    %v730 = vsub.s32 0, %v729
    %v731 = vrot.slane %v61, %v730
    %v732 = vsub.f32 %v722, %v731
    %v733 = vsub.f32 %v726, %v731
    %v734 = vand.u32 2147483647, %v732
    %v735 = vand.u32 2147483647, %v733
    %v736 = vlaneseq
    %v737 = vshrl.u32 %v736, 7
    %v738 = vsub.s32 0, %v737
    %v739 = vrot.slane %v67, %v738
    %v740 = vmul.f32 %v734, %v739
    %v741 = vmul.f32 %v735, %v739
    %v742 = vadd.f32 %v718, %v740
    %v743 = vadd.f32 %v719, %v741
    %744 = vset.pattern.permute.xlu0 17
    %745 = vperm.xlu0 %744, %v56
    %v746 = vpop.permute.xlu0 %745
    %748 = vset.pattern.permute.xlu0 17
    %749 = vperm.xlu0 %748, %v57
    %v750 = vpop.permute.xlu0 %749
    %v752 = vlaneseq
    %v753 = vshrl.u32 %v752, 7
    %v754 = vsub.s32 1, %v753
    %v755 = vrot.slane %v61, %v754
    %v756 = vsub.f32 %v746, %v755
    %v757 = vsub.f32 %v750, %v755
    %v758 = vand.u32 2147483647, %v756
    %v759 = vand.u32 2147483647, %v757
    %v760 = vlaneseq
    %v761 = vshrl.u32 %v760, 7
    %v762 = vsub.s32 1, %v761
    %v763 = vrot.slane %v67, %v762
    %v764 = vmul.f32 %v758, %v763
    %v765 = vmul.f32 %v759, %v763
    %v766 = vadd.f32 %v742, %v764
    %v767 = vadd.f32 %v743, %v765
    %768 = vset.pattern.permute.xlu0 18
    %769 = vperm.xlu0 %768, %v56
    %v770 = vpop.permute.xlu0 %769
    %772 = vset.pattern.permute.xlu0 18
    %773 = vperm.xlu0 %772, %v57
    %v774 = vpop.permute.xlu0 %773
    %v776 = vlaneseq
    %v777 = vshrl.u32 %v776, 7
    %v778 = vsub.s32 2, %v777
    %v779 = vrot.slane %v61, %v778
    %v780 = vsub.f32 %v770, %v779
    %v781 = vsub.f32 %v774, %v779
    %v782 = vand.u32 2147483647, %v780
    %v783 = vand.u32 2147483647, %v781
    %v784 = vlaneseq
    %v785 = vshrl.u32 %v784, 7
    %v786 = vsub.s32 2, %v785
    %v787 = vrot.slane %v67, %v786
    %v788 = vmul.f32 %v782, %v787
    %v789 = vmul.f32 %v783, %v787
    %v790 = vadd.f32 %v766, %v788
    %v791 = vadd.f32 %v767, %v789
    %792 = vset.pattern.permute.xlu0 19
    %793 = vperm.xlu0 %792, %v56
    %v794 = vpop.permute.xlu0 %793
    %796 = vset.pattern.permute.xlu0 19
    %797 = vperm.xlu0 %796, %v57
    %v798 = vpop.permute.xlu0 %797
    %v800 = vlaneseq
    %v801 = vshrl.u32 %v800, 7
    %v802 = vsub.s32 3, %v801
    %v803 = vrot.slane %v61, %v802
    %v804 = vsub.f32 %v794, %v803
    %v805 = vsub.f32 %v798, %v803
    %v806 = vand.u32 2147483647, %v804
    %v807 = vand.u32 2147483647, %v805
    %v808 = vlaneseq
    %v809 = vshrl.u32 %v808, 7
    %v810 = vsub.s32 3, %v809
    %v811 = vrot.slane %v67, %v810
    %v812 = vmul.f32 %v806, %v811
    %v813 = vmul.f32 %v807, %v811
    %v814 = vadd.f32 %v790, %v812
    %v815 = vadd.f32 %v791, %v813
    %816 = vset.pattern.permute.xlu0 20
    %817 = vperm.xlu0 %816, %v56
    %v818 = vpop.permute.xlu0 %817
    %820 = vset.pattern.permute.xlu0 20
    %821 = vperm.xlu0 %820, %v57
    %v822 = vpop.permute.xlu0 %821
    %v824 = vlaneseq
    %v825 = vshrl.u32 %v824, 7
    %v826 = vsub.s32 4, %v825
    %v827 = vrot.slane %v61, %v826
    %v828 = vsub.f32 %v818, %v827
    %v829 = vsub.f32 %v822, %v827
    %v830 = vand.u32 2147483647, %v828
    %v831 = vand.u32 2147483647, %v829
    %v832 = vlaneseq
    %v833 = vshrl.u32 %v832, 7
    %v834 = vsub.s32 4, %v833
    %v835 = vrot.slane %v67, %v834
    %v836 = vmul.f32 %v830, %v835
    %v837 = vmul.f32 %v831, %v835
    %v838 = vadd.f32 %v814, %v836
    %v839 = vadd.f32 %v815, %v837
    %840 = vset.pattern.permute.xlu0 21
    %841 = vperm.xlu0 %840, %v56
    %v842 = vpop.permute.xlu0 %841
    %844 = vset.pattern.permute.xlu0 21
    %845 = vperm.xlu0 %844, %v57
    %v846 = vpop.permute.xlu0 %845
    %v848 = vlaneseq
    %v849 = vshrl.u32 %v848, 7
    %v850 = vsub.s32 5, %v849
    %v851 = vrot.slane %v61, %v850
    %v852 = vsub.f32 %v842, %v851
    %v853 = vsub.f32 %v846, %v851
    %v854 = vand.u32 2147483647, %v852
    %v855 = vand.u32 2147483647, %v853
    %v856 = vlaneseq
    %v857 = vshrl.u32 %v856, 7
    %v858 = vsub.s32 5, %v857
    %v859 = vrot.slane %v67, %v858
    %v860 = vmul.f32 %v854, %v859
    %v861 = vmul.f32 %v855, %v859
    %v862 = vadd.f32 %v838, %v860
    %v863 = vadd.f32 %v839, %v861
    %864 = vset.pattern.permute.xlu0 22
    %865 = vperm.xlu0 %864, %v56
    %v866 = vpop.permute.xlu0 %865
    %868 = vset.pattern.permute.xlu0 22
    %869 = vperm.xlu0 %868, %v57
    %v870 = vpop.permute.xlu0 %869
    %v872 = vlaneseq
    %v873 = vshrl.u32 %v872, 7
    %v874 = vsub.s32 6, %v873
    %v875 = vrot.slane %v61, %v874
    %v876 = vsub.f32 %v866, %v875
    %v877 = vsub.f32 %v870, %v875
    %v878 = vand.u32 2147483647, %v876
    %v879 = vand.u32 2147483647, %v877
    %v880 = vlaneseq
    %v881 = vshrl.u32 %v880, 7
    %v882 = vsub.s32 6, %v881
    %v883 = vrot.slane %v67, %v882
    %v884 = vmul.f32 %v878, %v883
    %v885 = vmul.f32 %v879, %v883
    %v886 = vadd.f32 %v862, %v884
    %v887 = vadd.f32 %v863, %v885
    %888 = vset.pattern.permute.xlu0 23
    %889 = vperm.xlu0 %888, %v56
    %v890 = vpop.permute.xlu0 %889
    %892 = vset.pattern.permute.xlu0 23
    %893 = vperm.xlu0 %892, %v57
    %v894 = vpop.permute.xlu0 %893
    %v896 = vlaneseq
    %v897 = vshrl.u32 %v896, 7
    %v898 = vsub.s32 7, %v897
    %v899 = vrot.slane %v61, %v898
    %v900 = vsub.f32 %v890, %v899
    %v901 = vsub.f32 %v894, %v899
    %v902 = vand.u32 2147483647, %v900
    %v903 = vand.u32 2147483647, %v901
    %v904 = vlaneseq
    %v905 = vshrl.u32 %v904, 7
    %v906 = vsub.s32 7, %v905
    %v907 = vrot.slane %v67, %v906
    %v908 = vmul.f32 %v902, %v907
    %v909 = vmul.f32 %v903, %v907
    %v910 = vadd.f32 %v886, %v908
    %v911 = vadd.f32 %v887, %v909
    %912 = vset.pattern.permute.xlu0 24
    %913 = vperm.xlu0 %912, %v56
    %v914 = vpop.permute.xlu0 %913
    %916 = vset.pattern.permute.xlu0 24
    %917 = vperm.xlu0 %916, %v57
    %v918 = vpop.permute.xlu0 %917
    %v920 = vlaneseq
    %v921 = vshrl.u32 %v920, 7
    %v922 = vsub.s32 0, %v921
    %v923 = vrot.slane %v62, %v922
    %v924 = vsub.f32 %v914, %v923
    %v925 = vsub.f32 %v918, %v923
    %v926 = vand.u32 2147483647, %v924
    %v927 = vand.u32 2147483647, %v925
    %v928 = vlaneseq
    %v929 = vshrl.u32 %v928, 7
    %v930 = vsub.s32 0, %v929
    %v931 = vrot.slane %v68, %v930
    %v932 = vmul.f32 %v926, %v931
    %v933 = vmul.f32 %v927, %v931
    %v934 = vadd.f32 %v910, %v932
    %v935 = vadd.f32 %v911, %v933
    %936 = vset.pattern.permute.xlu0 25
    %937 = vperm.xlu0 %936, %v56
    %v938 = vpop.permute.xlu0 %937
    %940 = vset.pattern.permute.xlu0 25
    %941 = vperm.xlu0 %940, %v57
    %v942 = vpop.permute.xlu0 %941
    %v944 = vlaneseq
    %v945 = vshrl.u32 %v944, 7
    %v946 = vsub.s32 1, %v945
    %v947 = vrot.slane %v62, %v946
    %v948 = vsub.f32 %v938, %v947
    %v949 = vsub.f32 %v942, %v947
    %v950 = vand.u32 2147483647, %v948
    %v951 = vand.u32 2147483647, %v949
    %v952 = vlaneseq
    %v953 = vshrl.u32 %v952, 7
    %v954 = vsub.s32 1, %v953
    %v955 = vrot.slane %v68, %v954
    %v956 = vmul.f32 %v950, %v955
    %v957 = vmul.f32 %v951, %v955
    %v958 = vadd.f32 %v934, %v956
    %v959 = vadd.f32 %v935, %v957
    %960 = vset.pattern.permute.xlu0 26
    %961 = vperm.xlu0 %960, %v56
    %v962 = vpop.permute.xlu0 %961
    %964 = vset.pattern.permute.xlu0 26
    %965 = vperm.xlu0 %964, %v57
    %v966 = vpop.permute.xlu0 %965
    %v968 = vlaneseq
    %v969 = vshrl.u32 %v968, 7
    %v970 = vsub.s32 2, %v969
    %v971 = vrot.slane %v62, %v970
    %v972 = vsub.f32 %v962, %v971
    %v973 = vsub.f32 %v966, %v971
    %v974 = vand.u32 2147483647, %v972
    %v975 = vand.u32 2147483647, %v973
    %v976 = vlaneseq
    %v977 = vshrl.u32 %v976, 7
    %v978 = vsub.s32 2, %v977
    %v979 = vrot.slane %v68, %v978
    %v980 = vmul.f32 %v974, %v979
    %v981 = vmul.f32 %v975, %v979
    %v982 = vadd.f32 %v958, %v980
    %v983 = vadd.f32 %v959, %v981
    %984 = vset.pattern.permute.xlu0 27
    %985 = vperm.xlu0 %984, %v56
    %v986 = vpop.permute.xlu0 %985
    %988 = vset.pattern.permute.xlu0 27
    %989 = vperm.xlu0 %988, %v57
    %v990 = vpop.permute.xlu0 %989
    %v992 = vlaneseq
    %v993 = vshrl.u32 %v992, 7
    %v994 = vsub.s32 3, %v993
    %v995 = vrot.slane %v62, %v994
    %v996 = vsub.f32 %v986, %v995
    %v997 = vsub.f32 %v990, %v995
    %v998 = vand.u32 2147483647, %v996
    %v999 = vand.u32 2147483647, %v997
    %v1000 = vlaneseq
    %v1001 = vshrl.u32 %v1000, 7
    %v1002 = vsub.s32 3, %v1001
    %v1003 = vrot.slane %v68, %v1002
    %v1004 = vmul.f32 %v998, %v1003
    %v1005 = vmul.f32 %v999, %v1003
    %v1006 = vadd.f32 %v982, %v1004
    %v1007 = vadd.f32 %v983, %v1005
    %1008 = vset.pattern.permute.xlu0 28
    %1009 = vperm.xlu0 %1008, %v56
    %v1010 = vpop.permute.xlu0 %1009
    %1012 = vset.pattern.permute.xlu0 28
    %1013 = vperm.xlu0 %1012, %v57
    %v1014 = vpop.permute.xlu0 %1013
    %v1016 = vlaneseq
    %v1017 = vshrl.u32 %v1016, 7
    %v1018 = vsub.s32 4, %v1017
    %v1019 = vrot.slane %v62, %v1018
    %v1020 = vsub.f32 %v1010, %v1019
    %v1021 = vsub.f32 %v1014, %v1019
    %v1022 = vand.u32 2147483647, %v1020
    %v1023 = vand.u32 2147483647, %v1021
    %v1024 = vlaneseq
    %v1025 = vshrl.u32 %v1024, 7
    %v1026 = vsub.s32 4, %v1025
    %v1027 = vrot.slane %v68, %v1026
    %v1028 = vmul.f32 %v1022, %v1027
    %v1029 = vmul.f32 %v1023, %v1027
    %v1030 = vadd.f32 %v1006, %v1028
    %v1031 = vadd.f32 %v1007, %v1029
    %1032 = vset.pattern.permute.xlu0 29
    %1033 = vperm.xlu0 %1032, %v56
    %v1034 = vpop.permute.xlu0 %1033
    %1036 = vset.pattern.permute.xlu0 29
    %1037 = vperm.xlu0 %1036, %v57
    %v1038 = vpop.permute.xlu0 %1037
    %v1040 = vlaneseq
    %v1041 = vshrl.u32 %v1040, 7
    %v1042 = vsub.s32 5, %v1041
    %v1043 = vrot.slane %v62, %v1042
    %v1044 = vsub.f32 %v1034, %v1043
    %v1045 = vsub.f32 %v1038, %v1043
    %v1046 = vand.u32 2147483647, %v1044
    %v1047 = vand.u32 2147483647, %v1045
    %v1048 = vlaneseq
    %v1049 = vshrl.u32 %v1048, 7
    %v1050 = vsub.s32 5, %v1049
    %v1051 = vrot.slane %v68, %v1050
    %v1052 = vmul.f32 %v1046, %v1051
    %v1053 = vmul.f32 %v1047, %v1051
    %v1054 = vadd.f32 %v1030, %v1052
    %v1055 = vadd.f32 %v1031, %v1053
    %1056 = vset.pattern.permute.xlu0 30
    %1057 = vperm.xlu0 %1056, %v56
    %v1058 = vpop.permute.xlu0 %1057
    %1060 = vset.pattern.permute.xlu0 30
    %1061 = vperm.xlu0 %1060, %v57
    %v1062 = vpop.permute.xlu0 %1061
    %v1064 = vlaneseq
    %v1065 = vshrl.u32 %v1064, 7
    %v1066 = vsub.s32 6, %v1065
    %v1067 = vrot.slane %v62, %v1066
    %v1068 = vsub.f32 %v1058, %v1067
    %v1069 = vsub.f32 %v1062, %v1067
    %v1070 = vand.u32 2147483647, %v1068
    %v1071 = vand.u32 2147483647, %v1069
    %v1072 = vlaneseq
    %v1073 = vshrl.u32 %v1072, 7
    %v1074 = vsub.s32 6, %v1073
    %v1075 = vrot.slane %v68, %v1074
    %v1076 = vmul.f32 %v1070, %v1075
    %v1077 = vmul.f32 %v1071, %v1075
    %v1078 = vadd.f32 %v1054, %v1076
    %v1079 = vadd.f32 %v1055, %v1077
    %1080 = vset.pattern.permute.xlu0 31
    %1081 = vperm.xlu0 %1080, %v56
    %v1082 = vpop.permute.xlu0 %1081
    %1084 = vset.pattern.permute.xlu0 31
    %1085 = vperm.xlu0 %1084, %v57
    %v1086 = vpop.permute.xlu0 %1085
    %v1088 = vlaneseq
    %v1089 = vshrl.u32 %v1088, 7
    %v1090 = vsub.s32 7, %v1089
    %v1091 = vrot.slane %v62, %v1090
    %v1092 = vsub.f32 %v1082, %v1091
    %v1093 = vsub.f32 %v1086, %v1091
    %v1094 = vand.u32 2147483647, %v1092
    %v1095 = vand.u32 2147483647, %v1093
    %v1096 = vlaneseq
    %v1097 = vshrl.u32 %v1096, 7
    %v1098 = vsub.s32 7, %v1097
    %v1099 = vrot.slane %v68, %v1098
    %v1100 = vmul.f32 %v1094, %v1099
    %v1101 = vmul.f32 %v1095, %v1099
    %v1102 = vadd.f32 %v1078, %v1100
    %v1103 = vadd.f32 %v1079, %v1101
    %1104 = vset.pattern.permute.xlu0 32
    %1105 = vperm.xlu0 %1104, %v56
    %v1106 = vpop.permute.xlu0 %1105
    %1108 = vset.pattern.permute.xlu0 32
    %1109 = vperm.xlu0 %1108, %v57
    %v1110 = vpop.permute.xlu0 %1109
    %v1112 = vlaneseq
    %v1113 = vshrl.u32 %v1112, 7
    %v1114 = vsub.s32 0, %v1113
    %v1115 = vrot.slane %v63, %v1114
    %v1116 = vsub.f32 %v1106, %v1115
    %v1117 = vsub.f32 %v1110, %v1115
    %v1118 = vand.u32 2147483647, %v1116
    %v1119 = vand.u32 2147483647, %v1117
    %v1120 = vlaneseq
    %v1121 = vshrl.u32 %v1120, 7
    %v1122 = vsub.s32 0, %v1121
    %v1123 = vrot.slane %v69, %v1122
    %v1124 = vmul.f32 %v1118, %v1123
    %v1125 = vmul.f32 %v1119, %v1123
    %v1126 = vadd.f32 %v1102, %v1124
    %v1127 = vadd.f32 %v1103, %v1125
    %1128 = vset.pattern.permute.xlu0 33
    %1129 = vperm.xlu0 %1128, %v56
    %v1130 = vpop.permute.xlu0 %1129
    %1132 = vset.pattern.permute.xlu0 33
    %1133 = vperm.xlu0 %1132, %v57
    %v1134 = vpop.permute.xlu0 %1133
    %v1136 = vlaneseq
    %v1137 = vshrl.u32 %v1136, 7
    %v1138 = vsub.s32 1, %v1137
    %v1139 = vrot.slane %v63, %v1138
    %v1140 = vsub.f32 %v1130, %v1139
    %v1141 = vsub.f32 %v1134, %v1139
    %v1142 = vand.u32 2147483647, %v1140
    %v1143 = vand.u32 2147483647, %v1141
    %v1144 = vlaneseq
    %v1145 = vshrl.u32 %v1144, 7
    %v1146 = vsub.s32 1, %v1145
    %v1147 = vrot.slane %v69, %v1146
    %v1148 = vmul.f32 %v1142, %v1147
    %v1149 = vmul.f32 %v1143, %v1147
    %v1150 = vadd.f32 %v1126, %v1148
    %v1151 = vadd.f32 %v1127, %v1149
    %1152 = vset.pattern.permute.xlu0 34
    %1153 = vperm.xlu0 %1152, %v56
    %v1154 = vpop.permute.xlu0 %1153
    %1156 = vset.pattern.permute.xlu0 34
    %1157 = vperm.xlu0 %1156, %v57
    %v1158 = vpop.permute.xlu0 %1157
    %v1160 = vlaneseq
    %v1161 = vshrl.u32 %v1160, 7
    %v1162 = vsub.s32 2, %v1161
    %v1163 = vrot.slane %v63, %v1162
    %v1164 = vsub.f32 %v1154, %v1163
    %v1165 = vsub.f32 %v1158, %v1163
    %v1166 = vand.u32 2147483647, %v1164
    %v1167 = vand.u32 2147483647, %v1165
    %v1168 = vlaneseq
    %v1169 = vshrl.u32 %v1168, 7
    %v1170 = vsub.s32 2, %v1169
    %v1171 = vrot.slane %v69, %v1170
    %v1172 = vmul.f32 %v1166, %v1171
    %v1173 = vmul.f32 %v1167, %v1171
    %v1174 = vadd.f32 %v1150, %v1172
    %v1175 = vadd.f32 %v1151, %v1173
    %1176 = vset.pattern.permute.xlu0 35
    %1177 = vperm.xlu0 %1176, %v56
    %v1178 = vpop.permute.xlu0 %1177
    %1180 = vset.pattern.permute.xlu0 35
    %1181 = vperm.xlu0 %1180, %v57
    %v1182 = vpop.permute.xlu0 %1181
    %v1184 = vlaneseq
    %v1185 = vshrl.u32 %v1184, 7
    %v1186 = vsub.s32 3, %v1185
    %v1187 = vrot.slane %v63, %v1186
    %v1188 = vsub.f32 %v1178, %v1187
    %v1189 = vsub.f32 %v1182, %v1187
    %v1190 = vand.u32 2147483647, %v1188
    %v1191 = vand.u32 2147483647, %v1189
    %v1192 = vlaneseq
    %v1193 = vshrl.u32 %v1192, 7
    %v1194 = vsub.s32 3, %v1193
    %v1195 = vrot.slane %v69, %v1194
    %v1196 = vmul.f32 %v1190, %v1195
    %v1197 = vmul.f32 %v1191, %v1195
    %v1198 = vadd.f32 %v1174, %v1196
    %v1199 = vadd.f32 %v1175, %v1197
    %1200 = vset.pattern.permute.xlu0 36
    %1201 = vperm.xlu0 %1200, %v56
    %v1202 = vpop.permute.xlu0 %1201
    %1204 = vset.pattern.permute.xlu0 36
    %1205 = vperm.xlu0 %1204, %v57
    %v1206 = vpop.permute.xlu0 %1205
    %v1208 = vlaneseq
    %v1209 = vshrl.u32 %v1208, 7
    %v1210 = vsub.s32 4, %v1209
    %v1211 = vrot.slane %v63, %v1210
    %v1212 = vsub.f32 %v1202, %v1211
    %v1213 = vsub.f32 %v1206, %v1211
    %v1214 = vand.u32 2147483647, %v1212
    %v1215 = vand.u32 2147483647, %v1213
    %v1216 = vlaneseq
    %v1217 = vshrl.u32 %v1216, 7
    %v1218 = vsub.s32 4, %v1217
    %v1219 = vrot.slane %v69, %v1218
    %v1220 = vmul.f32 %v1214, %v1219
    %v1221 = vmul.f32 %v1215, %v1219
    %v1222 = vadd.f32 %v1198, %v1220
    %v1223 = vadd.f32 %v1199, %v1221
    %1224 = vset.pattern.permute.xlu0 37
    %1225 = vperm.xlu0 %1224, %v56
    %v1226 = vpop.permute.xlu0 %1225
    %1228 = vset.pattern.permute.xlu0 37
    %1229 = vperm.xlu0 %1228, %v57
    %v1230 = vpop.permute.xlu0 %1229
    %v1232 = vlaneseq
    %v1233 = vshrl.u32 %v1232, 7
    %v1234 = vsub.s32 5, %v1233
    %v1235 = vrot.slane %v63, %v1234
    %v1236 = vsub.f32 %v1226, %v1235
    %v1237 = vsub.f32 %v1230, %v1235
    %v1238 = vand.u32 2147483647, %v1236
    %v1239 = vand.u32 2147483647, %v1237
    %v1240 = vlaneseq
    %v1241 = vshrl.u32 %v1240, 7
    %v1242 = vsub.s32 5, %v1241
    %v1243 = vrot.slane %v69, %v1242
    %v1244 = vmul.f32 %v1238, %v1243
    %v1245 = vmul.f32 %v1239, %v1243
    %v1246 = vadd.f32 %v1222, %v1244
    %v1247 = vadd.f32 %v1223, %v1245
    %1248 = vset.pattern.permute.xlu0 38
    %1249 = vperm.xlu0 %1248, %v56
    %v1250 = vpop.permute.xlu0 %1249
    %1252 = vset.pattern.permute.xlu0 38
    %1253 = vperm.xlu0 %1252, %v57
    %v1254 = vpop.permute.xlu0 %1253
    %v1256 = vlaneseq
    %v1257 = vshrl.u32 %v1256, 7
    %v1258 = vsub.s32 6, %v1257
    %v1259 = vrot.slane %v63, %v1258
    %v1260 = vsub.f32 %v1250, %v1259
    %v1261 = vsub.f32 %v1254, %v1259
    %v1262 = vand.u32 2147483647, %v1260
    %v1263 = vand.u32 2147483647, %v1261
    %v1264 = vlaneseq
    %v1265 = vshrl.u32 %v1264, 7
    %v1266 = vsub.s32 6, %v1265
    %v1267 = vrot.slane %v69, %v1266
    %v1268 = vmul.f32 %v1262, %v1267
    %v1269 = vmul.f32 %v1263, %v1267
    %v1270 = vadd.f32 %v1246, %v1268
    %v1271 = vadd.f32 %v1247, %v1269
    %1272 = vset.pattern.permute.xlu0 39
    %1273 = vperm.xlu0 %1272, %v56
    %v1274 = vpop.permute.xlu0 %1273
    %1276 = vset.pattern.permute.xlu0 39
    %1277 = vperm.xlu0 %1276, %v57
    %v1278 = vpop.permute.xlu0 %1277
    %v1280 = vlaneseq
    %v1281 = vshrl.u32 %v1280, 7
    %v1282 = vsub.s32 7, %v1281
    %v1283 = vrot.slane %v63, %v1282
    %v1284 = vsub.f32 %v1274, %v1283
    %v1285 = vsub.f32 %v1278, %v1283
    %v1286 = vand.u32 2147483647, %v1284
    %v1287 = vand.u32 2147483647, %v1285
    %v1288 = vlaneseq
    %v1289 = vshrl.u32 %v1288, 7
    %v1290 = vsub.s32 7, %v1289
    %v1291 = vrot.slane %v69, %v1290
    %v1292 = vmul.f32 %v1286, %v1291
    %v1293 = vmul.f32 %v1287, %v1291
    %v1294 = vadd.f32 %v1270, %v1292
    %v1295 = vadd.f32 %v1271, %v1293
    %1296 = vset.pattern.permute.xlu0 40
    %1297 = vperm.xlu0 %1296, %v56
    %v1298 = vpop.permute.xlu0 %1297
    %1300 = vset.pattern.permute.xlu0 40
    %1301 = vperm.xlu0 %1300, %v57
    %v1302 = vpop.permute.xlu0 %1301
    %v1304 = vlaneseq
    %v1305 = vshrl.u32 %v1304, 7
    %v1306 = vsub.s32 0, %v1305
    %v1307 = vrot.slane %v64, %v1306
    %v1308 = vsub.f32 %v1298, %v1307
    %v1309 = vsub.f32 %v1302, %v1307
    %v1310 = vand.u32 2147483647, %v1308
    %v1311 = vand.u32 2147483647, %v1309
    %v1312 = vlaneseq
    %v1313 = vshrl.u32 %v1312, 7
    %v1314 = vsub.s32 0, %v1313
    %v1315 = vrot.slane %v70, %v1314
    %v1316 = vmul.f32 %v1310, %v1315
    %v1317 = vmul.f32 %v1311, %v1315
    %v1318 = vadd.f32 %v1294, %v1316
    %v1319 = vadd.f32 %v1295, %v1317
    %1320 = vset.pattern.permute.xlu0 41
    %1321 = vperm.xlu0 %1320, %v56
    %v1322 = vpop.permute.xlu0 %1321
    %1324 = vset.pattern.permute.xlu0 41
    %1325 = vperm.xlu0 %1324, %v57
    %v1326 = vpop.permute.xlu0 %1325
    %v1328 = vlaneseq
    %v1329 = vshrl.u32 %v1328, 7
    %v1330 = vsub.s32 1, %v1329
    %v1331 = vrot.slane %v64, %v1330
    %v1332 = vsub.f32 %v1322, %v1331
    %v1333 = vsub.f32 %v1326, %v1331
    %v1334 = vand.u32 2147483647, %v1332
    %v1335 = vand.u32 2147483647, %v1333
    %v1336 = vlaneseq
    %v1337 = vshrl.u32 %v1336, 7
    %v1338 = vsub.s32 1, %v1337
    %v1339 = vrot.slane %v70, %v1338
    %v1340 = vmul.f32 %v1334, %v1339
    %v1341 = vmul.f32 %v1335, %v1339
    %v1342 = vadd.f32 %v1318, %v1340
    %v1343 = vadd.f32 %v1319, %v1341
    %1344 = vset.pattern.permute.xlu0 42
    %1345 = vperm.xlu0 %1344, %v56
    %v1346 = vpop.permute.xlu0 %1345
    %1348 = vset.pattern.permute.xlu0 42
    %1349 = vperm.xlu0 %1348, %v57
    %v1350 = vpop.permute.xlu0 %1349
    %v1352 = vlaneseq
    %v1353 = vshrl.u32 %v1352, 7
    %v1354 = vsub.s32 2, %v1353
    %v1355 = vrot.slane %v64, %v1354
    %v1356 = vsub.f32 %v1346, %v1355
    %v1357 = vsub.f32 %v1350, %v1355
    %v1358 = vand.u32 2147483647, %v1356
    %v1359 = vand.u32 2147483647, %v1357
    %v1360 = vlaneseq
    %v1361 = vshrl.u32 %v1360, 7
    %v1362 = vsub.s32 2, %v1361
    %v1363 = vrot.slane %v70, %v1362
    %v1364 = vmul.f32 %v1358, %v1363
    %v1365 = vmul.f32 %v1359, %v1363
    %v1366 = vadd.f32 %v1342, %v1364
    %v1367 = vadd.f32 %v1343, %v1365
    %1368 = vset.pattern.permute.xlu0 43
    %1369 = vperm.xlu0 %1368, %v56
    %v1370 = vpop.permute.xlu0 %1369
    %1372 = vset.pattern.permute.xlu0 43
    %1373 = vperm.xlu0 %1372, %v57
    %v1374 = vpop.permute.xlu0 %1373
    %v1376 = vlaneseq
    %v1377 = vshrl.u32 %v1376, 7
    %v1378 = vsub.s32 3, %v1377
    %v1379 = vrot.slane %v64, %v1378
    %v1380 = vsub.f32 %v1370, %v1379
    %v1381 = vsub.f32 %v1374, %v1379
    %v1382 = vand.u32 2147483647, %v1380
    %v1383 = vand.u32 2147483647, %v1381
    %v1384 = vlaneseq
    %v1385 = vshrl.u32 %v1384, 7
    %v1386 = vsub.s32 3, %v1385
    %v1387 = vrot.slane %v70, %v1386
    %v1388 = vmul.f32 %v1382, %v1387
    %v1389 = vmul.f32 %v1383, %v1387
    %v1390 = vadd.f32 %v1366, %v1388
    %v1391 = vadd.f32 %v1367, %v1389
    %1393 = vset.pattern.permute.xlu0 0
    %1394 = vperm.xlu0 %1393, %v85
    %v1395 = vpop.permute.xlu0 %1394
    %1398 = vset.pattern.permute.xlu0 0
    %1399 = vperm.xlu0 %1398, %v86
    %v1400 = vpop.permute.xlu0 %1399
    %v1402 = vadd.f32 %v1395, %v157
    %v1403 = vadd.f32 %v1400, %v158
    %v1404 = vsub.f32 %v1402, %v316
    %v1405 = vsub.f32 %v1403, %v317
    %v1406 = vmul.f32 %v1390, %v333
    %v1407 = vmul.f32 %v1391, %v333
    %v1408 = vadd.f32 %v1404, %v1406
    %v1409 = vadd.f32 %v1405, %v1407
    %1410 = vst [vmem:[#allocation7] sm:$0xff] %v1408
    %1411 = vst [vmem:[#allocation7 + $0x8] sm:$0xff] %v1409
    // Predicated region
    $region34: #{tpu_custom_call.1} parent=1 // pred_check
      _
    $region35: #{tpu_custom_call.1} parent=1 // pred_check_branch
      %1413 = sbr.rel (0) target = $region37
    $region36: #{tpu_custom_call.1} parent=1 // pred_region
      %s1415 = ssub.s32 256, 256
      %1416 = vsyncadd [#allocation4], %s1415
      %s1417 = sshll.u32 [#allocation7], 4
      %s1418 = int_to_ptr.vmem [resolvable:$true] %s1417
      %1423 = dma.vmem_to_hbm [thread:$0]  %s1418, 256, %s6, [#allocation4], 128, 128, 8
    $region37: #{tpu_custom_call.1} parent=1 // pred_fallthru
      _
    // Predicated region
    $region38: #{tpu_custom_call.1} parent=1 // pred_check
      _
    $region39: #{tpu_custom_call.1} parent=1 // pred_check_branch
      %1425 = sbr.rel (0) target = $region41
    $region40: #{tpu_custom_call.1} parent=1 // pred_region
      %1426 = dma.done [#allocation4], 256
    $region41: #{tpu_custom_call.1} parent=1 // pred_fallthru
      _
    %1427 = vsyncpa [#allocation3], 1
    %1428 = vsyncpa [#allocation6], 1
    %1429 = vsyncpa [#allocation4], 1

</llo_original>
